<compile_context>
chip_gen: v7x
topology: tpu7x:2x2x1
jax: 0.10.0
libtpu: 0.0.40
codegen_flags: <defaults>
</compile_context>

<pallas_src>
import functools
import math

import jax
import jax.numpy as jnp
from jax.experimental import pallas as pl
from jax.experimental.pallas import tpu as pltpu


# ----------------------------- kernel helpers -----------------------------

def _gelu_tanh(x):
    # TODO(synk): PyTorch nn.GELU default is the exact erf formulation; Mosaic
    # lowers tanh/exp natively, so we use the tanh approximation (|diff|<1e-3).
    c = math.sqrt(2.0 / math.pi)
    return 0.5 * x * (1.0 + jnp.tanh(c * (x + 0.044715 * x * x * x)))


def _layer_norm(x, gamma, beta, eps=1e-5):
    # PyTorch LayerNorm: biased variance over the last axis, eps=1e-5.  f32.
    mu = jnp.mean(x, axis=-1, keepdims=True)
    xc = x - mu
    var = jnp.mean(xc * xc, axis=-1, keepdims=True)
    return xc * jax.lax.rsqrt(var + eps) * gamma + beta


# ------------------------------- the kernel -------------------------------

def vit_block_kernel(x_ref, g1_ref, b1_ref, wqkv_ref, wproj_ref, bproj_ref,
                     g2_ref, b2_ref, wfc1_ref, bfc1_ref, wfc2_ref, bfc2_ref,
                     o_ref, attn_buf, *, num_heads, head_dim):
    """One grid step = one batch element.  x_ref is (N, C)."""
    dim = num_heads * head_dim
    bf16 = jnp.bfloat16
    x_in = x_ref[...].astype(jnp.float32)                          # (N, C) f32

    # (1) norm1 (f32)
    xn = _layer_norm(x_in, g1_ref[...], b1_ref[...])

    # (2) multi-head self-attention (qkv_bias=False)
    #     One wide (N,C)x(C,3C) bf16 matmul for all heads / q,k,v.
    qkv = jnp.dot(xn.astype(bf16), wqkv_ref[...],
                  preferred_element_type=jnp.float32)               # (N, 3C) f32
    scale = 1.0 / math.sqrt(head_dim)

    # Static per-head loop; head outputs are scattered into a lane-resident
    # bf16 scratch so a single MXU-wide projection matmul follows (no concat).
    # TODO(synk): for real ViT sizes, stream KV flash-style + tile N to add a
    # second "parallel" grid axis (v7x 2-TC occupancy); unnecessary at toy N.
    for h in range(num_heads):
        lo = h * head_dim
        q = qkv[:, lo:lo + head_dim].astype(bf16)                   # (N, D)
        k = qkv[:, dim + lo:dim + lo + head_dim].astype(bf16)       # (N, D)
        v = qkv[:, 2 * dim + lo:2 * dim + lo + head_dim].astype(bf16)
        # q @ k.T without an explicit transpose (contract last axes).
        s = jax.lax.dot_general(q, k, (((1,), (1,)), ((), ())),
                                preferred_element_type=jnp.float32) * scale
        # softmax in f32; divide moved to the EUP via approx reciprocal.
        s = s - jnp.max(s, axis=-1, keepdims=True)
        p = jnp.exp(s)
        p = p * pl.reciprocal(jnp.sum(p, axis=-1, keepdims=True), approx=True)
        o_h = jnp.dot(p.astype(bf16), v,
                      preferred_element_type=jnp.float32)           # (N, D)
        attn_buf[:, lo:lo + head_dim] = o_h.astype(bf16)

    attn = jnp.dot(attn_buf[...], wproj_ref[...],
                   preferred_element_type=jnp.float32) + bproj_ref[...]

    # (3) shortcut (f32)
    x1 = x_in + attn

    # (4) norm2 (f32)
    xn2 = _layer_norm(x1, g2_ref[...], b2_ref[...])

    # (5) MLP (bf16 GEMMs, f32 accumulate / activation)
    h1 = jnp.dot(xn2.astype(bf16), wfc1_ref[...],
                 preferred_element_type=jnp.float32) + bfc1_ref[...]
    h1 = _gelu_tanh(h1)
    h2 = jnp.dot(h1.astype(bf16), wfc2_ref[...],
                 preferred_element_type=jnp.float32) + bfc2_ref[...]

    # (6) shortcut
    o_ref[...] = (x1 + h2).astype(o_ref.dtype)


# ------------------------------ host wrapper ------------------------------

def vit_block(x, params, num_heads):
    B, N, C = x.shape
    assert C % num_heads == 0
    head_dim = C // num_heads
    hidden = params["w_fc1"].shape[1]
    # TODO(synk): pad N to a multiple of 8 (with key masking in the softmax)
    # and C to a multiple of 128 for lane-dense stores at real ViT shapes.

    bf16 = jnp.bfloat16
    w_qkv = params["w_qkv"].astype(bf16)
    w_proj = params["w_proj"].astype(bf16)
    w_fc1 = params["w_fc1"].astype(bf16)
    w_fc2 = params["w_fc2"].astype(bf16)

    def full2d(shape):
        # Whole-array block, constant index map (weight resident across grid).
        # TODO(synk): pin weight blocks to single buffering (pl.Buffered(1))
        # for tighter v7x VMEM budgeting once that API is settled.
        return pl.BlockSpec(shape, lambda b: (0, 0))

    # Explicit VMEM budget: bf16 weights (double-buffered) + f32 working set,
    # clamped to stay under v7x's 64 MiB physical VMEM with headroom.
    weight_bytes = 2 * (C * 3 * C + C * C + C * hidden + hidden * C)
    act_bytes = 4 * N * (3 * C + hidden + N + 6 * C)
    vmem_limit = int(min(56 * 2 ** 20,
                         max(32 * 2 ** 20, 2 * weight_bytes + 3 * act_bytes)))

    kernel = functools.partial(vit_block_kernel,
                               num_heads=num_heads, head_dim=head_dim)

    return pl.pallas_call(
        kernel,
        out_shape=jax.ShapeDtypeStruct((B, N, C), x.dtype),
        grid_spec=pltpu.PrefetchScalarGridSpec(
            num_scalar_prefetch=0,
            grid=(B,),
            in_specs=[
                pl.BlockSpec((None, N, C), lambda b: (b, 0, 0)),  # x (per batch)
                full2d((1, C)), full2d((1, C)),                   # norm1 gamma/beta
                full2d((C, 3 * C)),                               # W_qkv (bf16)
                full2d((C, C)), full2d((1, C)),                   # W_proj, b_proj
                full2d((1, C)), full2d((1, C)),                   # norm2 gamma/beta
                full2d((C, hidden)), full2d((1, hidden)),         # fc1
                full2d((hidden, C)), full2d((1, C)),              # fc2
            ],
            out_specs=pl.BlockSpec((None, N, C), lambda b: (b, 0, 0)),
            scratch_shapes=[pltpu.VMEM((N, C), bf16)],            # head-output slab
        ),
        compiler_params=pltpu.CompilerParams(
            dimension_semantics=("parallel",),
            vmem_limit_bytes=vmem_limit),
    )(x,
      params["g1"], params["b1"],
      w_qkv,
      w_proj, params["b_proj"],
      params["g2"], params["b2"],
      w_fc1, params["b_fc1"],
      w_fc2, params["b_fc2"])


# --------------------------- pure-JAX reference ---------------------------

def vit_block_ref(x, params, num_heads):
    B, N, C = x.shape
    D = C // num_heads
    hp = jax.lax.Precision.HIGHEST

    def ln(v, g, b):
        mu = jnp.mean(v, axis=-1, keepdims=True)
        vc = v - mu
        var = jnp.mean(vc * vc, axis=-1, keepdims=True)
        return vc * jax.lax.rsqrt(var + 1e-5) * g + b

    xn = ln(x, params["g1"], params["b1"])
    qkv = jnp.einsum("bnc,cd->bnd", xn, params["w_qkv"], precision=hp)
    q, k, v = jnp.split(qkv, 3, axis=-1)
    q = q.reshape(B, N, num_heads, D).transpose(0, 2, 1, 3)
    k = k.reshape(B, N, num_heads, D).transpose(0, 2, 1, 3)
    v = v.reshape(B, N, num_heads, D).transpose(0, 2, 1, 3)
    s = jnp.einsum("bhnd,bhmd->bhnm", q, k, precision=hp) / math.sqrt(D)
    p = jax.nn.softmax(s, axis=-1)
    a = jnp.einsum("bhnm,bhmd->bhnd", p, v, precision=hp)
    a = a.transpose(0, 2, 1, 3).reshape(B, N, C)
    a = jnp.einsum("bnc,cd->bnd", a, params["w_proj"], precision=hp) + params["b_proj"]
    x1 = x + a
    xn2 = ln(x1, params["g2"], params["b2"])
    h1 = jnp.einsum("bnc,ch->bnh", xn2, params["w_fc1"], precision=hp) + params["b_fc1"]
    h1 = _gelu_tanh(h1)
    h2 = jnp.einsum("bnh,hc->bnc", h1, params["w_fc2"], precision=hp) + params["b_fc2"]
    return x1 + h2


# ----------------------------------- main ----------------------------------

if __name__ == "__main__":
    B, N, C = 2, 8, 32          # batch=2, seq=8, hidden dim=32
    num_heads = 4
    mlp_ratio = 4.0
    hidden = int(C * mlp_ratio)

    key = jax.random.PRNGKey(0)
    keys = jax.random.split(key, 8)
    scale = 0.02
    params = {
        "g1": jnp.ones((1, C), jnp.float32),
        "b1": jnp.zeros((1, C), jnp.float32),
        "w_qkv": scale * jax.random.normal(keys[0], (C, 3 * C), jnp.float32),
        "w_proj": scale * jax.random.normal(keys[1], (C, C), jnp.float32),
        "b_proj": scale * jax.random.normal(keys[2], (1, C), jnp.float32),
        "g2": jnp.ones((1, C), jnp.float32),
        "b2": jnp.zeros((1, C), jnp.float32),
        "w_fc1": scale * jax.random.normal(keys[3], (C, hidden), jnp.float32),
        "b_fc1": scale * jax.random.normal(keys[4], (1, hidden), jnp.float32),
        "w_fc2": scale * jax.random.normal(keys[5], (hidden, C), jnp.float32),
        "b_fc2": scale * jax.random.normal(keys[6], (1, C), jnp.float32),
    }
    x = jax.random.normal(keys[7], (B, N, C), jnp.float32)

    out = jax.block_until_ready(vit_block(x, params, num_heads))
    ref = vit_block_ref(x, params, num_heads)

    assert out.shape == (B, N, C)
    assert bool(jnp.all(jnp.isfinite(out)))
    # Tolerance accounts for bf16 MXU operands / bf16 weight quantization
    # (LayerNorm, softmax, residuals stay f32, bounding the error).
    assert bool(jnp.allclose(out, ref, atol=1e-2, rtol=1e-2)), (
        f"max abs diff {float(jnp.max(jnp.abs(out - ref)))}")
    print("KERNEL_OK")
</pallas_src>

<mosaic_0001>
module attributes {stable_mosaic.version = 11 : i64} {
  func.func @vit_block_kernel(%arg0: i32, %arg1: memref<1x8x32xf32, #tpu.memory_space<vmem>>, %arg2: memref<1x32xf32, #tpu.memory_space<vmem>>, %arg3: memref<1x32xf32, #tpu.memory_space<vmem>>, %arg4: memref<32x96xbf16, #tpu.memory_space<vmem>>, %arg5: memref<32x32xbf16, #tpu.memory_space<vmem>>, %arg6: memref<1x32xf32, #tpu.memory_space<vmem>>, %arg7: memref<1x32xf32, #tpu.memory_space<vmem>>, %arg8: memref<1x32xf32, #tpu.memory_space<vmem>>, %arg9: memref<32x128xbf16, #tpu.memory_space<vmem>>, %arg10: memref<1x128xf32, #tpu.memory_space<vmem>>, %arg11: memref<128x32xbf16, #tpu.memory_space<vmem>>, %arg12: memref<1x32xf32, #tpu.memory_space<vmem>>, %arg13: memref<1x8x32xf32, #tpu.memory_space<vmem>>, %arg14: memref<8x32xbf16, #tpu.memory_space<vmem>>) attributes {dimension_semantics = [#tpu.dimension_semantics<parallel>], iteration_bounds = array<i64: 2>, scalar_prefetch = 0 : i64, scratch_operands = 1 : i64, tpu.core_type = #tpu.core_type<tc>, window_params = [{transform_indices = @transform_0, window_bounds = array<i64: 1, 8, 32>}, {pipeline_mode = #tpu.pipeline_mode<synchronous>, transform_indices = @transform_1, window_bounds = array<i64: 1, 32>}, {pipeline_mode = #tpu.pipeline_mode<synchronous>, transform_indices = @transform_2, window_bounds = array<i64: 1, 32>}, {pipeline_mode = #tpu.pipeline_mode<synchronous>, transform_indices = @transform_3, window_bounds = array<i64: 32, 96>}, {pipeline_mode = #tpu.pipeline_mode<synchronous>, transform_indices = @transform_4, window_bounds = array<i64: 32, 32>}, {pipeline_mode = #tpu.pipeline_mode<synchronous>, transform_indices = @transform_5, window_bounds = array<i64: 1, 32>}, {pipeline_mode = #tpu.pipeline_mode<synchronous>, transform_indices = @transform_6, window_bounds = array<i64: 1, 32>}, {pipeline_mode = #tpu.pipeline_mode<synchronous>, transform_indices = @transform_7, window_bounds = array<i64: 1, 32>}, {pipeline_mode = #tpu.pipeline_mode<synchronous>, transform_indices = @transform_8, window_bounds = array<i64: 32, 128>}, {pipeline_mode = #tpu.pipeline_mode<synchronous>, transform_indices = @transform_9, window_bounds = array<i64: 1, 128>}, {pipeline_mode = #tpu.pipeline_mode<synchronous>, transform_indices = @transform_10, window_bounds = array<i64: 128, 32>}, {pipeline_mode = #tpu.pipeline_mode<synchronous>, transform_indices = @transform_11, window_bounds = array<i64: 1, 32>}, {transform_indices = @transform_12, window_bounds = array<i64: 1, 8, 32>}]} {
    %c0 = arith.constant 0 : index
    %c0_0 = arith.constant 0 : index
    %c0_1 = arith.constant 0 : index
    %0 = vector.load %arg1[%c0, %c0_0, %c0_1] : memref<1x8x32xf32, #tpu.memory_space<vmem>>, vector<1x8x32xf32>
    %1 = vector.shape_cast %0 : vector<1x8x32xf32> to vector<8x32xf32>
    %c0_2 = arith.constant 0 : index
    %c0_3 = arith.constant 0 : index
    %2 = vector.load %arg2[%c0_2, %c0_3] : memref<1x32xf32, #tpu.memory_space<vmem>>, vector<1x32xf32>
    %c0_4 = arith.constant 0 : index
    %c0_5 = arith.constant 0 : index
    %3 = vector.load %arg3[%c0_4, %c0_5] : memref<1x32xf32, #tpu.memory_space<vmem>>, vector<1x32xf32>
    %cst = arith.constant dense<0.000000e+00> : vector<8xf32>
    %4 = vector.multi_reduction <add>, %1, %cst [1] : vector<8x32xf32> to vector<8xf32>
    %5 = vector.shape_cast %4 : vector<8xf32> to vector<8x1xf32>
    %cst_6 = arith.constant 3.200000e+01 : f32
    %6 = vector.broadcast %cst_6 : f32 to vector<8x1xf32>
    %7 = arith.divf %5, %6 : vector<8x1xf32>
    %8 = vector.broadcast %7 : vector<8x1xf32> to vector<8x32xf32>
    %9 = arith.subf %1, %8 : vector<8x32xf32>
    %10 = arith.mulf %9, %9 : vector<8x32xf32>
    %cst_7 = arith.constant dense<0.000000e+00> : vector<8xf32>
    %11 = vector.multi_reduction <add>, %10, %cst_7 [1] : vector<8x32xf32> to vector<8xf32>
    %12 = vector.shape_cast %11 : vector<8xf32> to vector<8x1xf32>
    %cst_8 = arith.constant 3.200000e+01 : f32
    %13 = vector.broadcast %cst_8 : f32 to vector<8x1xf32>
    %14 = arith.divf %12, %13 : vector<8x1xf32>
    %cst_9 = arith.constant 9.99999974E-6 : f32
    %15 = vector.broadcast %cst_9 : f32 to vector<8x1xf32>
    %16 = arith.addf %14, %15 : vector<8x1xf32>
    %17 = math.rsqrt %16 : vector<8x1xf32>
    %18 = vector.broadcast %17 : vector<8x1xf32> to vector<8x32xf32>
    %19 = arith.mulf %9, %18 : vector<8x32xf32>
    %20 = vector.broadcast %2 : vector<1x32xf32> to vector<8x32xf32>
    %21 = arith.mulf %19, %20 : vector<8x32xf32>
    %22 = vector.broadcast %3 : vector<1x32xf32> to vector<8x32xf32>
    %23 = arith.addf %21, %22 : vector<8x32xf32>
    %24 = arith.truncf %23 : vector<8x32xf32> to vector<8x32xbf16>
    %c0_10 = arith.constant 0 : index
    %c0_11 = arith.constant 0 : index
    %25 = vector.load %arg4[%c0_10, %c0_11] : memref<32x96xbf16, #tpu.memory_space<vmem>>, vector<32x96xbf16>
    %cst_12 = arith.constant dense<0.000000e+00> : vector<8x96xf32>
    %26 = tpu.matmul %24, %25, %cst_12 {dimension_numbers = #tpu.dot_dimension_numbers<[1], [0], [0], [1], [0, 0, 1, 1], [], []>} : vector<8x32xbf16>, vector<32x96xbf16>, vector<8x96xf32> -> vector<8x96xf32>
    %27 = vector.extract_strided_slice %26 {offsets = [0, 0], sizes = [8, 8], strides = [1, 1]} : vector<8x96xf32> to vector<8x8xf32>
    %28 = arith.truncf %27 : vector<8x8xf32> to vector<8x8xbf16>
    %29 = vector.extract_strided_slice %26 {offsets = [0, 32], sizes = [8, 8], strides = [1, 1]} : vector<8x96xf32> to vector<8x8xf32>
    %30 = arith.truncf %29 : vector<8x8xf32> to vector<8x8xbf16>
    %31 = vector.extract_strided_slice %26 {offsets = [0, 64], sizes = [8, 8], strides = [1, 1]} : vector<8x96xf32> to vector<8x8xf32>
    %32 = arith.truncf %31 : vector<8x8xf32> to vector<8x8xbf16>
    %cst_13 = arith.constant dense<0.000000e+00> : vector<8x8xf32>
    %33 = tpu.matmul %28, %30, %cst_13 {dimension_numbers = #tpu.dot_dimension_numbers<[1], [1], [0], [0], [0, 0, 1, 0], [], []>} : vector<8x8xbf16>, vector<8x8xbf16>, vector<8x8xf32> -> vector<8x8xf32>
    %cst_14 = arith.constant 0.353553385 : f32
    %34 = vector.broadcast %cst_14 : f32 to vector<8x8xf32>
    %35 = arith.mulf %33, %34 : vector<8x8xf32>
    %cst_15 = arith.constant dense<0xFF800000> : vector<8xf32>
    %36 = vector.multi_reduction <maximumf>, %35, %cst_15 [1] : vector<8x8xf32> to vector<8xf32>
    %37 = vector.shape_cast %36 : vector<8xf32> to vector<8x1xf32>
    %38 = vector.broadcast %37 : vector<8x1xf32> to vector<8x8xf32>
    %39 = arith.subf %35, %38 : vector<8x8xf32>
    %40 = math.exp %39 : vector<8x8xf32>
    %cst_16 = arith.constant dense<0.000000e+00> : vector<8xf32>
    %41 = vector.multi_reduction <add>, %40, %cst_16 [1] : vector<8x8xf32> to vector<8xf32>
    %42 = vector.shape_cast %41 : vector<8xf32> to vector<8x1xf32>
    %43 = tpu.reciprocal %42 {approx = true} : vector<8x1xf32> -> vector<8x1xf32>
    %44 = vector.broadcast %43 : vector<8x1xf32> to vector<8x8xf32>
    %45 = arith.mulf %40, %44 : vector<8x8xf32>
    %46 = arith.truncf %45 : vector<8x8xf32> to vector<8x8xbf16>
    %cst_17 = arith.constant dense<0.000000e+00> : vector<8x8xf32>
    %47 = tpu.matmul %46, %32, %cst_17 {dimension_numbers = #tpu.dot_dimension_numbers<[1], [0], [0], [1], [0, 0, 1, 1], [], []>} : vector<8x8xbf16>, vector<8x8xbf16>, vector<8x8xf32> -> vector<8x8xf32>
    %48 = arith.truncf %47 : vector<8x8xf32> to vector<8x8xbf16>
    %c0_18 = arith.constant 0 : index
    %c0_19 = arith.constant 0 : index
    %49 = vector.load %arg14[%c0_18, %c0_19] : memref<8x32xbf16, #tpu.memory_space<vmem>>, vector<8x8xbf16>
    tpu.vector_store %arg14[%c0_18, %c0_19], %48 {strides = array<i32>} : memref<8x32xbf16, #tpu.memory_space<vmem>>, vector<8x8xbf16>,
    %50 = vector.extract_strided_slice %26 {offsets = [0, 8], sizes = [8, 8], strides = [1, 1]} : vector<8x96xf32> to vector<8x8xf32>
    %51 = arith.truncf %50 : vector<8x8xf32> to vector<8x8xbf16>
    %52 = vector.extract_strided_slice %26 {offsets = [0, 40], sizes = [8, 8], strides = [1, 1]} : vector<8x96xf32> to vector<8x8xf32>
    %53 = arith.truncf %52 : vector<8x8xf32> to vector<8x8xbf16>
    %54 = vector.extract_strided_slice %26 {offsets = [0, 72], sizes = [8, 8], strides = [1, 1]} : vector<8x96xf32> to vector<8x8xf32>
    %55 = arith.truncf %54 : vector<8x8xf32> to vector<8x8xbf16>
    %cst_20 = arith.constant dense<0.000000e+00> : vector<8x8xf32>
    %56 = tpu.matmul %51, %53, %cst_20 {dimension_numbers = #tpu.dot_dimension_numbers<[1], [1], [0], [0], [0, 0, 1, 0], [], []>} : vector<8x8xbf16>, vector<8x8xbf16>, vector<8x8xf32> -> vector<8x8xf32>
    %cst_21 = arith.constant 0.353553385 : f32
    %57 = vector.broadcast %cst_21 : f32 to vector<8x8xf32>
    %58 = arith.mulf %56, %57 : vector<8x8xf32>
    %cst_22 = arith.constant dense<0xFF800000> : vector<8xf32>
    %59 = vector.multi_reduction <maximumf>, %58, %cst_22 [1] : vector<8x8xf32> to vector<8xf32>
    %60 = vector.shape_cast %59 : vector<8xf32> to vector<8x1xf32>
    %61 = vector.broadcast %60 : vector<8x1xf32> to vector<8x8xf32>
    %62 = arith.subf %58, %61 : vector<8x8xf32>
    %63 = math.exp %62 : vector<8x8xf32>
    %cst_23 = arith.constant dense<0.000000e+00> : vector<8xf32>
    %64 = vector.multi_reduction <add>, %63, %cst_23 [1] : vector<8x8xf32> to vector<8xf32>
    %65 = vector.shape_cast %64 : vector<8xf32> to vector<8x1xf32>
    %66 = tpu.reciprocal %65 {approx = true} : vector<8x1xf32> -> vector<8x1xf32>
    %67 = vector.broadcast %66 : vector<8x1xf32> to vector<8x8xf32>
    %68 = arith.mulf %63, %67 : vector<8x8xf32>
    %69 = arith.truncf %68 : vector<8x8xf32> to vector<8x8xbf16>
    %cst_24 = arith.constant dense<0.000000e+00> : vector<8x8xf32>
    %70 = tpu.matmul %69, %55, %cst_24 {dimension_numbers = #tpu.dot_dimension_numbers<[1], [0], [0], [1], [0, 0, 1, 1], [], []>} : vector<8x8xbf16>, vector<8x8xbf16>, vector<8x8xf32> -> vector<8x8xf32>
    %71 = arith.truncf %70 : vector<8x8xf32> to vector<8x8xbf16>
    %c0_25 = arith.constant 0 : index
    %c8 = arith.constant 8 : index
    %72 = vector.load %arg14[%c0_25, %c8] : memref<8x32xbf16, #tpu.memory_space<vmem>>, vector<8x8xbf16>
    tpu.vector_store %arg14[%c0_25, %c8], %71 {strides = array<i32>} : memref<8x32xbf16, #tpu.memory_space<vmem>>, vector<8x8xbf16>,
    %73 = vector.extract_strided_slice %26 {offsets = [0, 16], sizes = [8, 8], strides = [1, 1]} : vector<8x96xf32> to vector<8x8xf32>
    %74 = arith.truncf %73 : vector<8x8xf32> to vector<8x8xbf16>
    %75 = vector.extract_strided_slice %26 {offsets = [0, 48], sizes = [8, 8], strides = [1, 1]} : vector<8x96xf32> to vector<8x8xf32>
    %76 = arith.truncf %75 : vector<8x8xf32> to vector<8x8xbf16>
    %77 = vector.extract_strided_slice %26 {offsets = [0, 80], sizes = [8, 8], strides = [1, 1]} : vector<8x96xf32> to vector<8x8xf32>
    %78 = arith.truncf %77 : vector<8x8xf32> to vector<8x8xbf16>
    %cst_26 = arith.constant dense<0.000000e+00> : vector<8x8xf32>
    %79 = tpu.matmul %74, %76, %cst_26 {dimension_numbers = #tpu.dot_dimension_numbers<[1], [1], [0], [0], [0, 0, 1, 0], [], []>} : vector<8x8xbf16>, vector<8x8xbf16>, vector<8x8xf32> -> vector<8x8xf32>
    %cst_27 = arith.constant 0.353553385 : f32
    %80 = vector.broadcast %cst_27 : f32 to vector<8x8xf32>
    %81 = arith.mulf %79, %80 : vector<8x8xf32>
    %cst_28 = arith.constant dense<0xFF800000> : vector<8xf32>
    %82 = vector.multi_reduction <maximumf>, %81, %cst_28 [1] : vector<8x8xf32> to vector<8xf32>
    %83 = vector.shape_cast %82 : vector<8xf32> to vector<8x1xf32>
    %84 = vector.broadcast %83 : vector<8x1xf32> to vector<8x8xf32>
    %85 = arith.subf %81, %84 : vector<8x8xf32>
    %86 = math.exp %85 : vector<8x8xf32>
    %cst_29 = arith.constant dense<0.000000e+00> : vector<8xf32>
    %87 = vector.multi_reduction <add>, %86, %cst_29 [1] : vector<8x8xf32> to vector<8xf32>
    %88 = vector.shape_cast %87 : vector<8xf32> to vector<8x1xf32>
    %89 = tpu.reciprocal %88 {approx = true} : vector<8x1xf32> -> vector<8x1xf32>
    %90 = vector.broadcast %89 : vector<8x1xf32> to vector<8x8xf32>
    %91 = arith.mulf %86, %90 : vector<8x8xf32>
    %92 = arith.truncf %91 : vector<8x8xf32> to vector<8x8xbf16>
    %cst_30 = arith.constant dense<0.000000e+00> : vector<8x8xf32>
    %93 = tpu.matmul %92, %78, %cst_30 {dimension_numbers = #tpu.dot_dimension_numbers<[1], [0], [0], [1], [0, 0, 1, 1], [], []>} : vector<8x8xbf16>, vector<8x8xbf16>, vector<8x8xf32> -> vector<8x8xf32>
    %94 = arith.truncf %93 : vector<8x8xf32> to vector<8x8xbf16>
    %c0_31 = arith.constant 0 : index
    %c16 = arith.constant 16 : index
    %95 = vector.load %arg14[%c0_31, %c16] : memref<8x32xbf16, #tpu.memory_space<vmem>>, vector<8x8xbf16>
    tpu.vector_store %arg14[%c0_31, %c16], %94 {strides = array<i32>} : memref<8x32xbf16, #tpu.memory_space<vmem>>, vector<8x8xbf16>,
    %96 = vector.extract_strided_slice %26 {offsets = [0, 24], sizes = [8, 8], strides = [1, 1]} : vector<8x96xf32> to vector<8x8xf32>
    %97 = arith.truncf %96 : vector<8x8xf32> to vector<8x8xbf16>
    %98 = vector.extract_strided_slice %26 {offsets = [0, 56], sizes = [8, 8], strides = [1, 1]} : vector<8x96xf32> to vector<8x8xf32>
    %99 = arith.truncf %98 : vector<8x8xf32> to vector<8x8xbf16>
    %100 = vector.extract_strided_slice %26 {offsets = [0, 88], sizes = [8, 8], strides = [1, 1]} : vector<8x96xf32> to vector<8x8xf32>
    %101 = arith.truncf %100 : vector<8x8xf32> to vector<8x8xbf16>
    %cst_32 = arith.constant dense<0.000000e+00> : vector<8x8xf32>
    %102 = tpu.matmul %97, %99, %cst_32 {dimension_numbers = #tpu.dot_dimension_numbers<[1], [1], [0], [0], [0, 0, 1, 0], [], []>} : vector<8x8xbf16>, vector<8x8xbf16>, vector<8x8xf32> -> vector<8x8xf32>
    %cst_33 = arith.constant 0.353553385 : f32
    %103 = vector.broadcast %cst_33 : f32 to vector<8x8xf32>
    %104 = arith.mulf %102, %103 : vector<8x8xf32>
    %cst_34 = arith.constant dense<0xFF800000> : vector<8xf32>
    %105 = vector.multi_reduction <maximumf>, %104, %cst_34 [1] : vector<8x8xf32> to vector<8xf32>
    %106 = vector.shape_cast %105 : vector<8xf32> to vector<8x1xf32>
    %107 = vector.broadcast %106 : vector<8x1xf32> to vector<8x8xf32>
    %108 = arith.subf %104, %107 : vector<8x8xf32>
    %109 = math.exp %108 : vector<8x8xf32>
    %cst_35 = arith.constant dense<0.000000e+00> : vector<8xf32>
    %110 = vector.multi_reduction <add>, %109, %cst_35 [1] : vector<8x8xf32> to vector<8xf32>
    %111 = vector.shape_cast %110 : vector<8xf32> to vector<8x1xf32>
    %112 = tpu.reciprocal %111 {approx = true} : vector<8x1xf32> -> vector<8x1xf32>
    %113 = vector.broadcast %112 : vector<8x1xf32> to vector<8x8xf32>
    %114 = arith.mulf %109, %113 : vector<8x8xf32>
    %115 = arith.truncf %114 : vector<8x8xf32> to vector<8x8xbf16>
    %cst_36 = arith.constant dense<0.000000e+00> : vector<8x8xf32>
    %116 = tpu.matmul %115, %101, %cst_36 {dimension_numbers = #tpu.dot_dimension_numbers<[1], [0], [0], [1], [0, 0, 1, 1], [], []>} : vector<8x8xbf16>, vector<8x8xbf16>, vector<8x8xf32> -> vector<8x8xf32>
    %117 = arith.truncf %116 : vector<8x8xf32> to vector<8x8xbf16>
    %c0_37 = arith.constant 0 : index
    %c24 = arith.constant 24 : index
    %118 = vector.load %arg14[%c0_37, %c24] : memref<8x32xbf16, #tpu.memory_space<vmem>>, vector<8x8xbf16>
    tpu.vector_store %arg14[%c0_37, %c24], %117 {strides = array<i32>} : memref<8x32xbf16, #tpu.memory_space<vmem>>, vector<8x8xbf16>,
    %c0_38 = arith.constant 0 : index
    %c0_39 = arith.constant 0 : index
    %119 = vector.load %arg14[%c0_38, %c0_39] : memref<8x32xbf16, #tpu.memory_space<vmem>>, vector<8x32xbf16>
    %c0_40 = arith.constant 0 : index
    %c0_41 = arith.constant 0 : index
    %120 = vector.load %arg5[%c0_40, %c0_41] : memref<32x32xbf16, #tpu.memory_space<vmem>>, vector<32x32xbf16>
    %cst_42 = arith.constant dense<0.000000e+00> : vector<8x32xf32>
    %121 = tpu.matmul %119, %120, %cst_42 {dimension_numbers = #tpu.dot_dimension_numbers<[1], [0], [0], [1], [0, 0, 1, 1], [], []>} : vector<8x32xbf16>, vector<32x32xbf16>, vector<8x32xf32> -> vector<8x32xf32>
    %c0_43 = arith.constant 0 : index
    %c0_44 = arith.constant 0 : index
    %122 = vector.load %arg6[%c0_43, %c0_44] : memref<1x32xf32, #tpu.memory_space<vmem>>, vector<1x32xf32>
    %123 = vector.broadcast %122 : vector<1x32xf32> to vector<8x32xf32>
    %124 = arith.addf %121, %123 : vector<8x32xf32>
    %125 = arith.addf %1, %124 : vector<8x32xf32>
    %c0_45 = arith.constant 0 : index
    %c0_46 = arith.constant 0 : index
    %126 = vector.load %arg7[%c0_45, %c0_46] : memref<1x32xf32, #tpu.memory_space<vmem>>, vector<1x32xf32>
    %c0_47 = arith.constant 0 : index
    %c0_48 = arith.constant 0 : index
    %127 = vector.load %arg8[%c0_47, %c0_48] : memref<1x32xf32, #tpu.memory_space<vmem>>, vector<1x32xf32>
    %cst_49 = arith.constant dense<0.000000e+00> : vector<8xf32>
    %128 = vector.multi_reduction <add>, %125, %cst_49 [1] : vector<8x32xf32> to vector<8xf32>
    %129 = vector.shape_cast %128 : vector<8xf32> to vector<8x1xf32>
    %cst_50 = arith.constant 3.200000e+01 : f32
    %130 = vector.broadcast %cst_50 : f32 to vector<8x1xf32>
    %131 = arith.divf %129, %130 : vector<8x1xf32>
    %132 = vector.broadcast %131 : vector<8x1xf32> to vector<8x32xf32>
    %133 = arith.subf %125, %132 : vector<8x32xf32>
    %134 = arith.mulf %133, %133 : vector<8x32xf32>
    %cst_51 = arith.constant dense<0.000000e+00> : vector<8xf32>
    %135 = vector.multi_reduction <add>, %134, %cst_51 [1] : vector<8x32xf32> to vector<8xf32>
    %136 = vector.shape_cast %135 : vector<8xf32> to vector<8x1xf32>
    %cst_52 = arith.constant 3.200000e+01 : f32
    %137 = vector.broadcast %cst_52 : f32 to vector<8x1xf32>
    %138 = arith.divf %136, %137 : vector<8x1xf32>
    %cst_53 = arith.constant 9.99999974E-6 : f32
    %139 = vector.broadcast %cst_53 : f32 to vector<8x1xf32>
    %140 = arith.addf %138, %139 : vector<8x1xf32>
    %141 = math.rsqrt %140 : vector<8x1xf32>
    %142 = vector.broadcast %141 : vector<8x1xf32> to vector<8x32xf32>
    %143 = arith.mulf %133, %142 : vector<8x32xf32>
    %144 = vector.broadcast %126 : vector<1x32xf32> to vector<8x32xf32>
    %145 = arith.mulf %143, %144 : vector<8x32xf32>
    %146 = vector.broadcast %127 : vector<1x32xf32> to vector<8x32xf32>
    %147 = arith.addf %145, %146 : vector<8x32xf32>
    %148 = arith.truncf %147 : vector<8x32xf32> to vector<8x32xbf16>
    %c0_54 = arith.constant 0 : index
    %c0_55 = arith.constant 0 : index
    %149 = vector.load %arg9[%c0_54, %c0_55] : memref<32x128xbf16, #tpu.memory_space<vmem>>, vector<32x128xbf16>
    %cst_56 = arith.constant dense<0.000000e+00> : vector<8x128xf32>
    %150 = tpu.matmul %148, %149, %cst_56 {dimension_numbers = #tpu.dot_dimension_numbers<[1], [0], [0], [1], [0, 0, 1, 1], [], []>} : vector<8x32xbf16>, vector<32x128xbf16>, vector<8x128xf32> -> vector<8x128xf32>
    %c0_57 = arith.constant 0 : index
    %c0_58 = arith.constant 0 : index
    %151 = vector.load %arg10[%c0_57, %c0_58] : memref<1x128xf32, #tpu.memory_space<vmem>>, vector<1x128xf32>
    %152 = vector.broadcast %151 : vector<1x128xf32> to vector<8x128xf32>
    %153 = arith.addf %150, %152 : vector<8x128xf32>
    %cst_59 = arith.constant 5.000000e-01 : f32
    %154 = vector.broadcast %cst_59 : f32 to vector<8x128xf32>
    %155 = arith.mulf %154, %153 : vector<8x128xf32>
    %cst_60 = arith.constant 4.471500e-02 : f32
    %156 = vector.broadcast %cst_60 : f32 to vector<8x128xf32>
    %157 = arith.mulf %156, %153 : vector<8x128xf32>
    %158 = arith.mulf %157, %153 : vector<8x128xf32>
    %159 = arith.mulf %158, %153 : vector<8x128xf32>
    %160 = arith.addf %153, %159 : vector<8x128xf32>
    %cst_61 = arith.constant 0.797884583 : f32
    %161 = vector.broadcast %cst_61 : f32 to vector<8x128xf32>
    %162 = arith.mulf %161, %160 : vector<8x128xf32>
    %163 = math.tanh %162 : vector<8x128xf32>
    %cst_62 = arith.constant 1.000000e+00 : f32
    %164 = vector.broadcast %cst_62 : f32 to vector<8x128xf32>
    %165 = arith.addf %164, %163 : vector<8x128xf32>
    %166 = arith.mulf %155, %165 : vector<8x128xf32>
    %167 = arith.truncf %166 : vector<8x128xf32> to vector<8x128xbf16>
    %c0_63 = arith.constant 0 : index
    %c0_64 = arith.constant 0 : index
    %168 = vector.load %arg11[%c0_63, %c0_64] : memref<128x32xbf16, #tpu.memory_space<vmem>>, vector<128x32xbf16>
    %cst_65 = arith.constant dense<0.000000e+00> : vector<8x32xf32>
    %169 = tpu.matmul %167, %168, %cst_65 {dimension_numbers = #tpu.dot_dimension_numbers<[1], [0], [0], [1], [0, 0, 1, 1], [], []>} : vector<8x128xbf16>, vector<128x32xbf16>, vector<8x32xf32> -> vector<8x32xf32>
    %c0_66 = arith.constant 0 : index
    %c0_67 = arith.constant 0 : index
    %170 = vector.load %arg12[%c0_66, %c0_67] : memref<1x32xf32, #tpu.memory_space<vmem>>, vector<1x32xf32>
    %171 = vector.broadcast %170 : vector<1x32xf32> to vector<8x32xf32>
    %172 = arith.addf %169, %171 : vector<8x32xf32>
    %173 = arith.addf %125, %172 : vector<8x32xf32>
    %c0_68 = arith.constant 0 : index
    %c0_69 = arith.constant 0 : index
    %c0_70 = arith.constant 0 : index
    %174 = vector.load %arg13[%c0_68, %c0_69, %c0_70] : memref<1x8x32xf32, #tpu.memory_space<vmem>>, vector<1x8x32xf32>
    %175 = vector.shape_cast %174 : vector<1x8x32xf32> to vector<8x32xf32>
    %176 = vector.shape_cast %173 : vector<8x32xf32> to vector<1x8x32xf32>
    tpu.vector_store %arg13[%c0_68, %c0_69, %c0_70], %176 {strides = array<i32>} : memref<1x8x32xf32, #tpu.memory_space<vmem>>, vector<1x8x32xf32>,
    return
  }
  func.func @transform_0(%arg0: i32) -> (i32, i32, i32) {
    %c0_i32 = arith.constant 0 : i32
    %c0_i32_0 = arith.constant 0 : i32
    %c0_i32_1 = arith.constant 0 : i32
    return %arg0, %c0_i32, %c0_i32_0 : i32, i32, i32
  }
  func.func @transform_1(%arg0: i32) -> (i32, i32) {
    %c0_i32 = arith.constant 0 : i32
    %c0_i32_0 = arith.constant 0 : i32
    %c0_i32_1 = arith.constant 0 : i32
    return %c0_i32, %c0_i32_0 : i32, i32
  }
  func.func @transform_2(%arg0: i32) -> (i32, i32) {
    %c0_i32 = arith.constant 0 : i32
    %c0_i32_0 = arith.constant 0 : i32
    %c0_i32_1 = arith.constant 0 : i32
    return %c0_i32, %c0_i32_0 : i32, i32
  }
  func.func @transform_3(%arg0: i32) -> (i32, i32) {
    %c0_i32 = arith.constant 0 : i32
    %c0_i32_0 = arith.constant 0 : i32
    %c0_i32_1 = arith.constant 0 : i32
    return %c0_i32, %c0_i32_0 : i32, i32
  }
  func.func @transform_4(%arg0: i32) -> (i32, i32) {
    %c0_i32 = arith.constant 0 : i32
    %c0_i32_0 = arith.constant 0 : i32
    %c0_i32_1 = arith.constant 0 : i32
    return %c0_i32, %c0_i32_0 : i32, i32
  }
  func.func @transform_5(%arg0: i32) -> (i32, i32) {
    %c0_i32 = arith.constant 0 : i32
    %c0_i32_0 = arith.constant 0 : i32
    %c0_i32_1 = arith.constant 0 : i32
    return %c0_i32, %c0_i32_0 : i32, i32
  }
  func.func @transform_6(%arg0: i32) -> (i32, i32) {
    %c0_i32 = arith.constant 0 : i32
    %c0_i32_0 = arith.constant 0 : i32
    %c0_i32_1 = arith.constant 0 : i32
    return %c0_i32, %c0_i32_0 : i32, i32
  }
  func.func @transform_7(%arg0: i32) -> (i32, i32) {
    %c0_i32 = arith.constant 0 : i32
    %c0_i32_0 = arith.constant 0 : i32
    %c0_i32_1 = arith.constant 0 : i32
    return %c0_i32, %c0_i32_0 : i32, i32
  }
  func.func @transform_8(%arg0: i32) -> (i32, i32) {
    %c0_i32 = arith.constant 0 : i32
    %c0_i32_0 = arith.constant 0 : i32
    %c0_i32_1 = arith.constant 0 : i32
    return %c0_i32, %c0_i32_0 : i32, i32
  }
  func.func @transform_9(%arg0: i32) -> (i32, i32) {
    %c0_i32 = arith.constant 0 : i32
    %c0_i32_0 = arith.constant 0 : i32
    %c0_i32_1 = arith.constant 0 : i32
    return %c0_i32, %c0_i32_0 : i32, i32
  }
  func.func @transform_10(%arg0: i32) -> (i32, i32) {
    %c0_i32 = arith.constant 0 : i32
    %c0_i32_0 = arith.constant 0 : i32
    %c0_i32_1 = arith.constant 0 : i32
    return %c0_i32, %c0_i32_0 : i32, i32
  }
  func.func @transform_11(%arg0: i32) -> (i32, i32) {
    %c0_i32 = arith.constant 0 : i32
    %c0_i32_0 = arith.constant 0 : i32
    %c0_i32_1 = arith.constant 0 : i32
    return %c0_i32, %c0_i32_0 : i32, i32
  }
  func.func @transform_12(%arg0: i32) -> (i32, i32, i32) {
    %c0_i32 = arith.constant 0 : i32
    %c0_i32_0 = arith.constant 0 : i32
    %c0_i32_1 = arith.constant 0 : i32
    return %arg0, %c0_i32, %c0_i32_0 : i32, i32, i32
  }
}

</mosaic_0001>

<llo_original>
// kernel: tpu_custom_call.1
$region0: #{tpu_custom_call.1}
  #allocation0 [shape = 'u32[]', space=smem, size = 0x4, offset = 0x4, fixed_abs, tag = 'smem constant byte address 0x4 - core index']
  #allocation1 [shape = 'u32[144,128]{1,0:T(1,128)}', space=vmem, size = 0x12000, scoped, tag = 'internal scratch']
  #allocation2 [shape = 'bf16[8,32]{1,0:T(8,128)(2,1)}', space=vmem, size = 0x800, scoped, tag = 'scratch operand']
  %s0 = inlined_call_operand.vmem [shape: f32[2,8,32], index: 0, kind: input, shape index: {}]
  %s1 = inlined_call_operand.vmem [shape: f32[1,32], index: 1, kind: input, shape index: {}]
  %s2 = inlined_call_operand.vmem [shape: f32[1,32], index: 2, kind: input, shape index: {}]
  %s3 = inlined_call_operand.vmem [shape: bf16[32,96], index: 3, kind: input, shape index: {}]
  %s4 = inlined_call_operand.vmem [shape: bf16[32,32], index: 4, kind: input, shape index: {}]
  %s5 = inlined_call_operand.vmem [shape: f32[1,32], index: 5, kind: input, shape index: {}]
  %s6 = inlined_call_operand.vmem [shape: f32[1,32], index: 6, kind: input, shape index: {}]
  %s7 = inlined_call_operand.vmem [shape: f32[1,32], index: 7, kind: input, shape index: {}]
  %s8 = inlined_call_operand.vmem [shape: bf16[32,128], index: 8, kind: input, shape index: {}]
  %s9 = inlined_call_operand.vmem [shape: f32[1,128], index: 9, kind: input, shape index: {}]
  %s10 = inlined_call_operand.vmem [shape: bf16[128,32], index: 10, kind: input, shape index: {}]
  %s11 = inlined_call_operand.vmem [shape: f32[1,32], index: 11, kind: input, shape index: {}]
  %s12 = inlined_call_operand.hbm [shape: f32[2,8,32], index: 12, kind: output, shape index: {}]
  %s13 = sld [smem:[#allocation0]]
  $region81: #{tpu_custom_call.1} parent=0
    _
  %s15 = ssub.s32 1, %s13
  %s16 = scalar_select 0, %s15, %s13
  $region1: #{tpu_custom_call.1} parent=0
    #allocation3 [shape = 'u8[8192]{0}', space=vmem, size = 0x2000, scoped, tag = 'output window, operand 0']
    #allocation4 [shape = 's32[2]{0}', space=sflag, size = 0x8, scoped, tag = 'scoped memory for tpu_custom_call.1']
    %17 = vsyncpa [#allocation4], 0
    %s18 = scalar_lea.sflag [#allocation4], 1
    %19 = vsyncpa %s18, 0
    loop: start=0, step=1, limit=4
    $region2: #{tpu_custom_call.1} parent=1 // loop_pre_header
      _
    $region3: #{tpu_custom_call.1} parent=1 // loop_header
      %s21 = sphi 0, %s25
      %p22 = scmp.ge.s32.totalorder %s21, 4
      %s31 = sphi 0, %s33
      %s34 = sphi 0, %s31
      %s35 = sphi 0, %s34
      %s51 = sphi 0, %s35
      %s55 = sphi 0, %s55
      %s57 = sphi 0, %s55
      %s58 = sphi 0, %s57
      %s72 = sphi 0, %s58
      %s76 = sphi 0, %s76
      %s78 = sphi 0, %s76
      %s79 = sphi 0, %s78
      %s93 = sphi 0, %s79
      %s97 = sphi 0, %s97
      %s99 = sphi 0, %s97
      %s100 = sphi 0, %s99
      %s114 = sphi 0, %s100
      %s118 = sphi 0, %s118
      %s120 = sphi 0, %s118
      %s121 = sphi 0, %s120
      %s135 = sphi 0, %s121
      %s139 = sphi 0, %s139
      %s141 = sphi 0, %s139
      %s142 = sphi 0, %s141
      %s156 = sphi 0, %s142
      %s160 = sphi 0, %s160
      %s162 = sphi 0, %s160
      %s163 = sphi 0, %s162
      %s177 = sphi 0, %s163
      %s181 = sphi 0, %s181
      %s183 = sphi 0, %s181
      %s184 = sphi 0, %s183
      %s198 = sphi 0, %s184
      %s202 = sphi 0, %s202
      %s204 = sphi 0, %s202
      %s205 = sphi 0, %s204
      %s219 = sphi 0, %s205
      %s223 = sphi 0, %s223
      %s225 = sphi 0, %s223
      %s226 = sphi 0, %s225
      %s240 = sphi 0, %s226
      %s244 = sphi 0, %s244
      %s246 = sphi 0, %s244
      %s247 = sphi 0, %s246
      %s261 = sphi 0, %s247
      %s265 = sphi 0, %s265
      %s267 = sphi 0, %s265
      %s268 = sphi 0, %s267
      %s282 = sphi 0, %s268
      %s288 = sphi 0, %s290
      %s291 = sphi 0, %s288
      %s292 = sphi 0, %s291
      %s308 = sphi 0, %s292
    $region4: #{tpu_custom_call.1} parent=1 // loop_header_branch
      %24 = sbr.rel (%p22) target = $region8
    $region5: #{tpu_custom_call.1} parent=1 // loop_body
      %s26 = ssub.s32 %s21, 1
      %s27 = ssub.s32 %s21, 2
      %s28 = sadd.s32 %s21, 1
      %s29 = ssub.s32 %s21, %s28
      %p30 = scmp.eq.s32.totalorder %s29, 0
      %s32 = sadd.s32 %s31, 1
      %s33 = scalar_select %p30, %s31, %s32
      %p36 = pneg %p30
      %p37 = scmp.eq.s32.totalorder %s21, 1
      %p38 = por %p36, %p37
      %p39 = scmp.ne.s32.totalorder %s31, %s34
      %p40 = scmp.eq.s32.totalorder %s21, 0
      %p41 = por %p39, %p40
      %p42 = scmp.ne.s32.totalorder %s31, %s34
      %p43 = scmp.eq.s32.totalorder %s26, 1
      %p44 = por %p42, %p43
      %p45 = scmp.ne.s32.totalorder %s34, %s35
      %p46 = scmp.eq.s32.totalorder %s26, 0
      %p47 = por %p45, %p46
      %p48 = scmp.ne.s32.totalorder %s34, %s35
      %p49 = scmp.eq.s32.totalorder %s27, 1
      %p50 = por %p48, %p49
      %p52 = scmp.ne.s32.totalorder %s35, %s51
      %p53 = scmp.eq.s32.totalorder %s27, 0
      %p54 = por %p52, %p53
      %s56 = sadd.s32 %s55, 1
      %p59 = scmp.eq.s32.totalorder %s21, 1
      %p60 = scmp.ne.s32.totalorder %s55, %s57
      %p61 = scmp.eq.s32.totalorder %s21, 0
      %p62 = por %p60, %p61
      %p63 = scmp.ne.s32.totalorder %s55, %s57
      %p64 = scmp.eq.s32.totalorder %s26, 1
      %p65 = por %p63, %p64
      %p66 = scmp.ne.s32.totalorder %s57, %s58
      %p67 = scmp.eq.s32.totalorder %s26, 0
      %p68 = por %p66, %p67
      %p69 = scmp.ne.s32.totalorder %s57, %s58
      %p70 = scmp.eq.s32.totalorder %s27, 1
      %p71 = por %p69, %p70
      %p73 = scmp.ne.s32.totalorder %s58, %s72
      %p74 = scmp.eq.s32.totalorder %s27, 0
      %p75 = por %p73, %p74
      %s77 = sadd.s32 %s76, 1
      %p80 = scmp.eq.s32.totalorder %s21, 1
      %p81 = scmp.ne.s32.totalorder %s76, %s78
      %p82 = scmp.eq.s32.totalorder %s21, 0
      %p83 = por %p81, %p82
      %p84 = scmp.ne.s32.totalorder %s76, %s78
      %p85 = scmp.eq.s32.totalorder %s26, 1
      %p86 = por %p84, %p85
      %p87 = scmp.ne.s32.totalorder %s78, %s79
      %p88 = scmp.eq.s32.totalorder %s26, 0
      %p89 = por %p87, %p88
      %p90 = scmp.ne.s32.totalorder %s78, %s79
      %p91 = scmp.eq.s32.totalorder %s27, 1
      %p92 = por %p90, %p91
      %p94 = scmp.ne.s32.totalorder %s79, %s93
      %p95 = scmp.eq.s32.totalorder %s27, 0
      %p96 = por %p94, %p95
      %s98 = sadd.s32 %s97, 1
      %p101 = scmp.eq.s32.totalorder %s21, 1
      %p102 = scmp.ne.s32.totalorder %s97, %s99
      %p103 = scmp.eq.s32.totalorder %s21, 0
      %p104 = por %p102, %p103
      %p105 = scmp.ne.s32.totalorder %s97, %s99
      %p106 = scmp.eq.s32.totalorder %s26, 1
      %p107 = por %p105, %p106
      %p108 = scmp.ne.s32.totalorder %s99, %s100
      %p109 = scmp.eq.s32.totalorder %s26, 0
      %p110 = por %p108, %p109
      %p111 = scmp.ne.s32.totalorder %s99, %s100
      %p112 = scmp.eq.s32.totalorder %s27, 1
      %p113 = por %p111, %p112
      %p115 = scmp.ne.s32.totalorder %s100, %s114
      %p116 = scmp.eq.s32.totalorder %s27, 0
      %p117 = por %p115, %p116
      %s119 = sadd.s32 %s118, 1
      %p122 = scmp.eq.s32.totalorder %s21, 1
      %p123 = scmp.ne.s32.totalorder %s118, %s120
      %p124 = scmp.eq.s32.totalorder %s21, 0
      %p125 = por %p123, %p124
      %p126 = scmp.ne.s32.totalorder %s118, %s120
      %p127 = scmp.eq.s32.totalorder %s26, 1
      %p128 = por %p126, %p127
      %p129 = scmp.ne.s32.totalorder %s120, %s121
      %p130 = scmp.eq.s32.totalorder %s26, 0
      %p131 = por %p129, %p130
      %p132 = scmp.ne.s32.totalorder %s120, %s121
      %p133 = scmp.eq.s32.totalorder %s27, 1
      %p134 = por %p132, %p133
      %p136 = scmp.ne.s32.totalorder %s121, %s135
      %p137 = scmp.eq.s32.totalorder %s27, 0
      %p138 = por %p136, %p137
      %s140 = sadd.s32 %s139, 1
      %p143 = scmp.eq.s32.totalorder %s21, 1
      %p144 = scmp.ne.s32.totalorder %s139, %s141
      %p145 = scmp.eq.s32.totalorder %s21, 0
      %p146 = por %p144, %p145
      %p147 = scmp.ne.s32.totalorder %s139, %s141
      %p148 = scmp.eq.s32.totalorder %s26, 1
      %p149 = por %p147, %p148
      %p150 = scmp.ne.s32.totalorder %s141, %s142
      %p151 = scmp.eq.s32.totalorder %s26, 0
      %p152 = por %p150, %p151
      %p153 = scmp.ne.s32.totalorder %s141, %s142
      %p154 = scmp.eq.s32.totalorder %s27, 1
      %p155 = por %p153, %p154
      %p157 = scmp.ne.s32.totalorder %s142, %s156
      %p158 = scmp.eq.s32.totalorder %s27, 0
      %p159 = por %p157, %p158
      %s161 = sadd.s32 %s160, 1
      %p164 = scmp.eq.s32.totalorder %s21, 1
      %p165 = scmp.ne.s32.totalorder %s160, %s162
      %p166 = scmp.eq.s32.totalorder %s21, 0
      %p167 = por %p165, %p166
      %p168 = scmp.ne.s32.totalorder %s160, %s162
      %p169 = scmp.eq.s32.totalorder %s26, 1
      %p170 = por %p168, %p169
      %p171 = scmp.ne.s32.totalorder %s162, %s163
      %p172 = scmp.eq.s32.totalorder %s26, 0
      %p173 = por %p171, %p172
      %p174 = scmp.ne.s32.totalorder %s162, %s163
      %p175 = scmp.eq.s32.totalorder %s27, 1
      %p176 = por %p174, %p175
      %p178 = scmp.ne.s32.totalorder %s163, %s177
      %p179 = scmp.eq.s32.totalorder %s27, 0
      %p180 = por %p178, %p179
      %s182 = sadd.s32 %s181, 1
      %p185 = scmp.eq.s32.totalorder %s21, 1
      %p186 = scmp.ne.s32.totalorder %s181, %s183
      %p187 = scmp.eq.s32.totalorder %s21, 0
      %p188 = por %p186, %p187
      %p189 = scmp.ne.s32.totalorder %s181, %s183
      %p190 = scmp.eq.s32.totalorder %s26, 1
      %p191 = por %p189, %p190
      %p192 = scmp.ne.s32.totalorder %s183, %s184
      %p193 = scmp.eq.s32.totalorder %s26, 0
      %p194 = por %p192, %p193
      %p195 = scmp.ne.s32.totalorder %s183, %s184
      %p196 = scmp.eq.s32.totalorder %s27, 1
      %p197 = por %p195, %p196
      %p199 = scmp.ne.s32.totalorder %s184, %s198
      %p200 = scmp.eq.s32.totalorder %s27, 0
      %p201 = por %p199, %p200
      %s203 = sadd.s32 %s202, 1
      %p206 = scmp.eq.s32.totalorder %s21, 1
      %p207 = scmp.ne.s32.totalorder %s202, %s204
      %p208 = scmp.eq.s32.totalorder %s21, 0
      %p209 = por %p207, %p208
      %p210 = scmp.ne.s32.totalorder %s202, %s204
      %p211 = scmp.eq.s32.totalorder %s26, 1
      %p212 = por %p210, %p211
      %p213 = scmp.ne.s32.totalorder %s204, %s205
      %p214 = scmp.eq.s32.totalorder %s26, 0
      %p215 = por %p213, %p214
      %p216 = scmp.ne.s32.totalorder %s204, %s205
      %p217 = scmp.eq.s32.totalorder %s27, 1
      %p218 = por %p216, %p217
      %p220 = scmp.ne.s32.totalorder %s205, %s219
      %p221 = scmp.eq.s32.totalorder %s27, 0
      %p222 = por %p220, %p221
      %s224 = sadd.s32 %s223, 1
      %p227 = scmp.eq.s32.totalorder %s21, 1
      %p228 = scmp.ne.s32.totalorder %s223, %s225
      %p229 = scmp.eq.s32.totalorder %s21, 0
      %p230 = por %p228, %p229
      %p231 = scmp.ne.s32.totalorder %s223, %s225
      %p232 = scmp.eq.s32.totalorder %s26, 1
      %p233 = por %p231, %p232
      %p234 = scmp.ne.s32.totalorder %s225, %s226
      %p235 = scmp.eq.s32.totalorder %s26, 0
      %p236 = por %p234, %p235
      %p237 = scmp.ne.s32.totalorder %s225, %s226
      %p238 = scmp.eq.s32.totalorder %s27, 1
      %p239 = por %p237, %p238
      %p241 = scmp.ne.s32.totalorder %s226, %s240
      %p242 = scmp.eq.s32.totalorder %s27, 0
      %p243 = por %p241, %p242
      %s245 = sadd.s32 %s244, 1
      %p248 = scmp.eq.s32.totalorder %s21, 1
      %p249 = scmp.ne.s32.totalorder %s244, %s246
      %p250 = scmp.eq.s32.totalorder %s21, 0
      %p251 = por %p249, %p250
      %p252 = scmp.ne.s32.totalorder %s244, %s246
      %p253 = scmp.eq.s32.totalorder %s26, 1
      %p254 = por %p252, %p253
      %p255 = scmp.ne.s32.totalorder %s246, %s247
      %p256 = scmp.eq.s32.totalorder %s26, 0
      %p257 = por %p255, %p256
      %p258 = scmp.ne.s32.totalorder %s246, %s247
      %p259 = scmp.eq.s32.totalorder %s27, 1
      %p260 = por %p258, %p259
      %p262 = scmp.ne.s32.totalorder %s247, %s261
      %p263 = scmp.eq.s32.totalorder %s27, 0
      %p264 = por %p262, %p263
      %s266 = sadd.s32 %s265, 1
      %p269 = scmp.eq.s32.totalorder %s21, 1
      %p270 = scmp.ne.s32.totalorder %s265, %s267
      %p271 = scmp.eq.s32.totalorder %s21, 0
      %p272 = por %p270, %p271
      %p273 = scmp.ne.s32.totalorder %s265, %s267
      %p274 = scmp.eq.s32.totalorder %s26, 1
      %p275 = por %p273, %p274
      %p276 = scmp.ne.s32.totalorder %s267, %s268
      %p277 = scmp.eq.s32.totalorder %s26, 0
      %p278 = por %p276, %p277
      %p279 = scmp.ne.s32.totalorder %s267, %s268
      %p280 = scmp.eq.s32.totalorder %s27, 1
      %p281 = por %p279, %p280
      %p283 = scmp.ne.s32.totalorder %s268, %s282
      %p284 = scmp.eq.s32.totalorder %s27, 0
      %p285 = por %p283, %p284
      %s286 = ssub.s32 %s21, %s28
      %p287 = scmp.eq.s32.totalorder %s286, 0
      %s289 = sadd.s32 %s288, 1
      %s290 = scalar_select %p287, %s288, %s289
      %p293 = pneg %p287
      %p294 = scmp.eq.s32.totalorder %s21, 1
      %p295 = por %p293, %p294
      %p296 = scmp.ne.s32.totalorder %s288, %s291
      %p297 = scmp.eq.s32.totalorder %s21, 0
      %p298 = por %p296, %p297
      %p299 = scmp.ne.s32.totalorder %s288, %s291
      %p300 = scmp.eq.s32.totalorder %s26, 1
      %p301 = por %p299, %p300
      %p302 = scmp.ne.s32.totalorder %s291, %s292
      %p303 = scmp.eq.s32.totalorder %s26, 0
      %p304 = por %p302, %p303
      %p305 = scmp.ne.s32.totalorder %s291, %s292
      %p306 = scmp.eq.s32.totalorder %s27, 1
      %p307 = por %p305, %p306
      %p309 = scmp.ne.s32.totalorder %s292, %s308
      %p310 = scmp.eq.s32.totalorder %s27, 0
      %p311 = por %p309, %p310
      %p312 = scmp.le.s32.totalorder 1, %s21
      %p313 = scmp.lt.s32.totalorder %s21, 3
      %p314 = pnand %p312, %p313
      %p315 = pneg %p314
      // Predicated region
      $region9: #{tpu_custom_call.1} parent=5 // pred_check
        _
      $region10: #{tpu_custom_call.1} parent=5 // pred_check_branch
        %317 = sbr.rel (%p314) target = $region12
      $region11: #{tpu_custom_call.1} parent=5 // pred_region
        %s318 = ssub.s32 %s21, 1
        // Predicated region
        $region13: #{tpu_custom_call.1} parent=11 // pred_check
          %p319 = pneg %p68
        $region14: #{tpu_custom_call.1} parent=11 // pred_check_branch
          %321 = sbr.rel (%p319) target = $region16
        $region15: #{tpu_custom_call.1} parent=11 // pred_region
          _
        $region16: #{tpu_custom_call.1} parent=11 // pred_fallthru
          _
        // Predicated region
        $region17: #{tpu_custom_call.1} parent=11 // pred_check
          %p322 = pneg %p89
        $region18: #{tpu_custom_call.1} parent=11 // pred_check_branch
          %324 = sbr.rel (%p322) target = $region20
        $region19: #{tpu_custom_call.1} parent=11 // pred_region
          _
        $region20: #{tpu_custom_call.1} parent=11 // pred_fallthru
          _
        // Predicated region
        $region21: #{tpu_custom_call.1} parent=11 // pred_check
          %p325 = pneg %p110
        $region22: #{tpu_custom_call.1} parent=11 // pred_check_branch
          %327 = sbr.rel (%p325) target = $region24
        $region23: #{tpu_custom_call.1} parent=11 // pred_region
          _
        $region24: #{tpu_custom_call.1} parent=11 // pred_fallthru
          _
        // Predicated region
        $region25: #{tpu_custom_call.1} parent=11 // pred_check
          %p328 = pneg %p131
        $region26: #{tpu_custom_call.1} parent=11 // pred_check_branch
          %330 = sbr.rel (%p328) target = $region28
        $region27: #{tpu_custom_call.1} parent=11 // pred_region
          _
        $region28: #{tpu_custom_call.1} parent=11 // pred_fallthru
          _
        // Predicated region
        $region29: #{tpu_custom_call.1} parent=11 // pred_check
          %p331 = pneg %p152
        $region30: #{tpu_custom_call.1} parent=11 // pred_check_branch
          %333 = sbr.rel (%p331) target = $region32
        $region31: #{tpu_custom_call.1} parent=11 // pred_region
          _
        $region32: #{tpu_custom_call.1} parent=11 // pred_fallthru
          _
        // Predicated region
        $region33: #{tpu_custom_call.1} parent=11 // pred_check
          %p334 = pneg %p173
        $region34: #{tpu_custom_call.1} parent=11 // pred_check_branch
          %336 = sbr.rel (%p334) target = $region36
        $region35: #{tpu_custom_call.1} parent=11 // pred_region
          _
        $region36: #{tpu_custom_call.1} parent=11 // pred_fallthru
          _
        // Predicated region
        $region37: #{tpu_custom_call.1} parent=11 // pred_check
          %p337 = pneg %p194
        $region38: #{tpu_custom_call.1} parent=11 // pred_check_branch
          %339 = sbr.rel (%p337) target = $region40
        $region39: #{tpu_custom_call.1} parent=11 // pred_region
          _
        $region40: #{tpu_custom_call.1} parent=11 // pred_fallthru
          _
        // Predicated region
        $region41: #{tpu_custom_call.1} parent=11 // pred_check
          %p340 = pneg %p215
        $region42: #{tpu_custom_call.1} parent=11 // pred_check_branch
          %342 = sbr.rel (%p340) target = $region44
        $region43: #{tpu_custom_call.1} parent=11 // pred_region
          _
        $region44: #{tpu_custom_call.1} parent=11 // pred_fallthru
          _
        // Predicated region
        $region45: #{tpu_custom_call.1} parent=11 // pred_check
          %p343 = pneg %p236
        $region46: #{tpu_custom_call.1} parent=11 // pred_check_branch
          %345 = sbr.rel (%p343) target = $region48
        $region47: #{tpu_custom_call.1} parent=11 // pred_region
          _
        $region48: #{tpu_custom_call.1} parent=11 // pred_fallthru
          _
        // Predicated region
        $region49: #{tpu_custom_call.1} parent=11 // pred_check
          %p346 = pneg %p257
        $region50: #{tpu_custom_call.1} parent=11 // pred_check_branch
          %348 = sbr.rel (%p346) target = $region52
        $region51: #{tpu_custom_call.1} parent=11 // pred_region
          _
        $region52: #{tpu_custom_call.1} parent=11 // pred_fallthru
          _
        // Predicated region
        $region53: #{tpu_custom_call.1} parent=11 // pred_check
          %p349 = pneg %p278
        $region54: #{tpu_custom_call.1} parent=11 // pred_check_branch
          %351 = sbr.rel (%p349) target = $region56
        $region55: #{tpu_custom_call.1} parent=11 // pred_region
          _
        $region56: #{tpu_custom_call.1} parent=11 // pred_fallthru
          _
      $region12: #{tpu_custom_call.1} parent=5 // pred_fallthru
        _
      %p352 = scmp.lt.s32.totalorder %s21, 2
      // Predicated region
      $region57: #{tpu_custom_call.1} parent=5 // pred_check
        %p353 = pneg %p352
      $region58: #{tpu_custom_call.1} parent=5 // pred_check_branch
        %355 = sbr.rel (%p353) target = $region60
      $region59: #{tpu_custom_call.1} parent=5 // pred_region
        // Predicated region
        $region61: #{tpu_custom_call.1} parent=59 // pred_check
          %p356 = pneg %p41
        $region62: #{tpu_custom_call.1} parent=59 // pred_check_branch
          %358 = sbr.rel (%p356) target = $region64
        $region63: #{tpu_custom_call.1} parent=59 // pred_region
          %p359 = scmp.lt.s32.totalorder %s21, 1
          %s360 = scalar_select %p359, %s21, 1
          %s361 = smul.addr %s360, 8
          %s362 = scalar_lea.vmem %s0, %s361
        $region64: #{tpu_custom_call.1} parent=59 // pred_fallthru
          _
      $region60: #{tpu_custom_call.1} parent=5 // pred_fallthru
        _
      %p363 = scmp.le.s32.totalorder 1, %s21
      %p364 = scmp.lt.s32.totalorder %s21, 3
      %p365 = pnand %p363, %p364
      %p366 = pneg %p365
      // Predicated region
      $region65: #{tpu_custom_call.1} parent=5 // pred_check
        _
      $region66: #{tpu_custom_call.1} parent=5 // pred_check_branch
        %368 = sbr.rel (%p365) target = $region68
      $region67: #{tpu_custom_call.1} parent=5 // pred_region
        %s369 = ssub.s32 %s21, 1
        %p370 = scmp.lt.s32.totalorder %s26, 1
        %s371 = scalar_select %p370, %s26, 1
        %s372 = smul.addr %s371, 8
        %s373 = scalar_lea.vmem %s0, %s372
        %p374 = pneg %p47
        %p375 = pneg %p44
        %p376 = pneg %p68
        %p377 = pneg %p65
        %p378 = pneg %p89
        %p379 = pneg %p86
        %p380 = pneg %p110
        %p381 = pneg %p107
        %p382 = pneg %p131
        %p383 = pneg %p128
        %p384 = pneg %p152
        %p385 = pneg %p149
        %p386 = pneg %p173
        %p387 = pneg %p170
        %p388 = pneg %p194
        %p389 = pneg %p191
        %p390 = pneg %p215
        %p391 = pneg %p212
        %p392 = pneg %p236
        %p393 = pneg %p233
        %p394 = pneg %p257
        %p395 = pneg %p254
        %p396 = pneg %p278
        %p397 = pneg %p275
        %p398 = pneg %p304
        %p399 = pneg %p301
        %s400 = sand.u32 %s291, 1
        %s401 = scalar_lea.sflag [#allocation4], %s400
        %s402 = sand.u32 %s291, 1
        %s403 = smul.addr %s402, 8
        %s404 = scalar_lea.vmem [#allocation3], %s403
        %p405 = scmp.lt.s32.totalorder %s26, 1
        %s406 = scalar_select %p405, %s26, 1
        %s407 = smul.addr %s406, 8
        %s408 = scalar_lea.vmem %s0, %s407
        %v410 = vld [vmem:[%s408] sm:$0xff]
        %v411 = vld [vmem:[%s1] sm:$0x1]
        %v412 = vld [vmem:[%s2] sm:$0x1]
        %vm413 = vcmask 261120
        %v414 = vsel %vm413, %v410, 0.0
        %415 = vadd.xlane.f32.xlu0 %v414
        %v416 = vpop.xlane.xlu0 %415
        %v417 = vrcp.pop 32.0
        %v418 = vmul.f32 %v416, %v417
        %v419 = vsub.f32 %v410, %v418
        %v420 = vmul.f32 %v419, %v419
        %v421 = vsel %vm413, %v420, 0.0
        %422 = vadd.xlane.f32.xlu0 %v421
        %v423 = vpop.xlane.xlu0 %422
        %v424 = vmul.f32 %v423, %v417
        %v425 = vadd.f32 %v424, 1e-05
        %v426 = vrsqrt.pop %v425
        %v427 = vmul.f32 %v419, %v426
        %v429 = vlaneseq
        %v430 = vshrl.u32 %v429, 7
        %v431 = vsub.s32 0, %v430
        %v432 = vrot.slane %v411, %v431
        %v434 = vmul.f32 %v427, %v432
        %v436 = vlaneseq
        %v437 = vshrl.u32 %v436, 7
        %v438 = vsub.s32 0, %v437
        %v439 = vrot.slane %v412, %v438
        %v441 = vadd.f32 %v434, %v439
        %v442 = vpack.c.bf16 %v441, %v441
        %v443 = vld [vmem:[%s3] sm:$0xf]
        %v444 = vld [vmem:[%s3 + $0x4] sm:$0xf]
        %v445 = vld [vmem:[%s3 + $0x8] sm:$0xf]
        %v446 = vld [vmem:[%s3 + $0xc] sm:$0xf]
        %v451 = vunpack.c.l.b16 %v443
        %v452 = vunpack.c.l.b16 %v444
        %v453 = vunpack.c.l.b16 %v445
        %v454 = vunpack.c.l.b16 %v446
        %v455 = vpack.c.b16 %v452, %v451
        %v456 = vpack.c.b16 %v454, %v453
        %v460 = vsel %vm413, %v442, 0
        %462 = vmatprep.subr.bf16.mxu0 0
        %463 = vmatpush1.bf16.msra.mxu0 %v455
        %464 = vmatprep.subr.bf16.mxu0 0
        %465 = vmatpush1.bf16.msra.mxu0 %v456
        %466 = vmatprep.subr.bf16.mxu0 0
        %467 = vmatpush1.bf16.msra.mxu0 0
        %468 = vmatprep.subr.bf16.mxu0 0
        %469 = vmatpush1.bf16.msra.mxu0 0
        %470 = vmatprep.subr.bf16.mxu0 0
        %471 = vmatpush1.bf16.msra.mxu0 0
        %472 = vmatprep.subr.bf16.mxu0 0
        %473 = vmatpush1.bf16.msra.mxu0 0
        %474 = vmatprep.subr.bf16.mxu0 0
        %475 = vmatpush1.bf16.msra.mxu0 0
        %476 = vmatprep.subr.bf16.mxu0 0
        %477 = vmatpush1.bf16.msra.mxu0 0
        %478 = vmatprep.subr.bf16.mxu0 0
        %479 = vmatpush1.bf16.msra.mxu0 0
        %480 = vmatprep.subr.bf16.mxu0 0
        %481 = vmatpush1.bf16.msra.mxu0 0
        %482 = vmatprep.subr.bf16.mxu0 0
        %483 = vmatpush1.bf16.msra.mxu0 0
        %484 = vmatprep.subr.bf16.mxu0 0
        %485 = vmatpush1.bf16.msra.mxu0 0
        %486 = vmatprep.subr.bf16.mxu0 0
        %487 = vmatpush1.bf16.msra.mxu0 0
        %488 = vmatprep.subr.bf16.mxu0 0
        %489 = vmatpush1.bf16.msra.mxu0 0
        %490 = vmatprep.subr.bf16.mxu0 0
        %491 = vmatpush1.bf16.msra.mxu0 0
        %492 = vmatprep.subr.bf16.mxu0 0
        %493 = vmatpush1.bf16.msra.mxu0 0
        %494 = vmatprep.mubr.bf16.mxu0 0
        %495 = vmatmul.mubr.bf16.gmra.mrb[0].mxu0 %v460
        %v496 = vpop.f32.mrb[0].mxu0
        %v497 = vadd.f32 0.0, %v496
        %v498 = vpop.f32.mrb[0].mxu0
        %v499 = vpop.f32.mrb[0].mxu0
        %v500 = vpop.f32.mrb[0].mxu0
        %501 = vdwg.mxu0
        %v502 = vpack.c.bf16 %v497, %v497
        %504 = vrot.lane.b32.xlu0 %v502, 96
        %v505 = vpop.permute.xlu0 %504
        %vm506 = vcmask 64512
        %v508 = vsel %vm506, %v502, 0
        %v511 = vsel %vm506, %v505, 0
        %513 = vmatprep.subr.bf16.mxu0 0
        %514 = vmatpush1.bf16.xpose.msra.mxu0 %v511
        %515 = vmatprep.subr.bf16.mxu0 0
        %516 = vmatpush1.bf16.xpose.msra.mxu0 0
        %517 = vmatprep.subr.bf16.mxu0 0
        %518 = vmatpush1.bf16.xpose.msra.mxu0 0
        %519 = vmatprep.subr.bf16.mxu0 0
        %520 = vmatpush1.bf16.xpose.msra.mxu0 0
        %521 = vmatprep.subr.bf16.mxu0 0
        %522 = vmatpush1.bf16.xpose.msra.mxu0 0
        %523 = vmatprep.subr.bf16.mxu0 0
        %524 = vmatpush1.bf16.xpose.msra.mxu0 0
        %525 = vmatprep.subr.bf16.mxu0 0
        %526 = vmatpush1.bf16.xpose.msra.mxu0 0
        %527 = vmatprep.subr.bf16.mxu0 0
        %528 = vmatpush1.bf16.xpose.msra.mxu0 0
        %529 = vmatprep.subr.bf16.mxu0 0
        %530 = vmatpush1.bf16.xpose.msra.mxu0 0
        %531 = vmatprep.subr.bf16.mxu0 0
        %532 = vmatpush1.bf16.xpose.msra.mxu0 0
        %533 = vmatprep.subr.bf16.mxu0 0
        %534 = vmatpush1.bf16.xpose.msra.mxu0 0
        %535 = vmatprep.subr.bf16.mxu0 0
        %536 = vmatpush1.bf16.xpose.msra.mxu0 0
        %537 = vmatprep.subr.bf16.mxu0 0
        %538 = vmatpush1.bf16.xpose.msra.mxu0 0
        %539 = vmatprep.subr.bf16.mxu0 0
        %540 = vmatpush1.bf16.xpose.msra.mxu0 0
        %541 = vmatprep.subr.bf16.mxu0 0
        %542 = vmatpush1.bf16.xpose.msra.mxu0 0
        %543 = vmatprep.subr.bf16.mxu0 0
        %544 = vmatpush1.bf16.xpose.msra.mxu0 0
        %545 = vmatprep.mubr.bf16.mxu0 0
        %546 = vmatmul.mubr.bf16.gmra.mrb[0].mxu0 %v508
        %v547 = vpop.f32.mrb[0].mxu0
        %v548 = vadd.f32 0.0, %v547
        %v549 = vpop.f32.mrb[0].mxu0
        %v550 = vpop.f32.mrb[0].mxu0
        %v551 = vpop.f32.mrb[0].mxu0
        %552 = vdwg.mxu0
        %v553 = vmul.f32 %v548, 0.35355338
        %v554 = vsel %vm506, %v553, -inf
        %555 = vmax.xlane.f32.xlu0 %v554
        %v556 = vpop.xlane.xlu0 %555
        %v557 = vsub.f32 %v553, %v556
        %v558 = vmul.f32 %v557, 1.442695
        %v559 = vpow.pop %v558
        %v560 = vsel %vm506, %v559, 0.0
        %561 = vadd.xlane.f32.xlu0 %v560
        %v562 = vpop.xlane.xlu0 %561
        %v563 = vrcp.pop %v562
        %v564 = vmul.f32 %v559, %v563
        %v565 = vpack.c.bf16 %v564, %v564
        %566 = vrot.lane.b32.xlu0 %v502, 64
        %v567 = vpop.permute.xlu0 %566
        %v569 = vsel %vm506, %v565, 0
        %vm571 = vcmask 1043456
        %v573 = vsel %vm571, %v567, 0
        %575 = vmatprep.subr.bf16.mxu0 0
        %576 = vmatpush1.bf16.msra.mxu0 %v573
        %577 = vmatprep.subr.bf16.mxu0 0
        %578 = vmatpush1.bf16.msra.mxu0 0
        %579 = vmatprep.subr.bf16.mxu0 0
        %580 = vmatpush1.bf16.msra.mxu0 0
        %581 = vmatprep.subr.bf16.mxu0 0
        %582 = vmatpush1.bf16.msra.mxu0 0
        %583 = vmatprep.subr.bf16.mxu0 0
        %584 = vmatpush1.bf16.msra.mxu0 0
        %585 = vmatprep.subr.bf16.mxu0 0
        %586 = vmatpush1.bf16.msra.mxu0 0
        %587 = vmatprep.subr.bf16.mxu0 0
        %588 = vmatpush1.bf16.msra.mxu0 0
        %589 = vmatprep.subr.bf16.mxu0 0
        %590 = vmatpush1.bf16.msra.mxu0 0
        %591 = vmatprep.subr.bf16.mxu0 0
        %592 = vmatpush1.bf16.msra.mxu0 0
        %593 = vmatprep.subr.bf16.mxu0 0
        %594 = vmatpush1.bf16.msra.mxu0 0
        %595 = vmatprep.subr.bf16.mxu0 0
        %596 = vmatpush1.bf16.msra.mxu0 0
        %597 = vmatprep.subr.bf16.mxu0 0
        %598 = vmatpush1.bf16.msra.mxu0 0
        %599 = vmatprep.subr.bf16.mxu0 0
        %600 = vmatpush1.bf16.msra.mxu0 0
        %601 = vmatprep.subr.bf16.mxu0 0
        %602 = vmatpush1.bf16.msra.mxu0 0
        %603 = vmatprep.subr.bf16.mxu0 0
        %604 = vmatpush1.bf16.msra.mxu0 0
        %605 = vmatprep.subr.bf16.mxu0 0
        %606 = vmatpush1.bf16.msra.mxu0 0
        %607 = vmatprep.mubr.bf16.mxu0 0
        %608 = vmatmul.mubr.bf16.gmra.mrb[0].mxu0 %v569
        %v609 = vpop.f32.mrb[0].mxu0
        %v610 = vadd.f32 0.0, %v609
        %v611 = vpop.f32.mrb[0].mxu0
        %v612 = vpop.f32.mrb[0].mxu0
        %v613 = vpop.f32.mrb[0].mxu0
        %614 = vdwg.mxu0
        %v615 = vpack.c.bf16 %v610, %v610
        %vm616 = vcmask 60416
        %617 = vst.msk [vmem:[#allocation2] sm:$0xf] %vm616, %v615
        %618 = vrot.lane.b32.xlu0 %v502, 120
        %v619 = vpop.permute.xlu0 %618
        %620 = vrot.lane.b32.xlu0 %v502, 88
        %v621 = vpop.permute.xlu0 %620
        %v623 = vsel %vm506, %v619, 0
        %v626 = vsel %vm506, %v621, 0
        %628 = vmatprep.subr.bf16.mxu0 0
        %629 = vmatpush1.bf16.xpose.msra.mxu0 %v626
        %630 = vmatprep.subr.bf16.mxu0 0
        %631 = vmatpush1.bf16.xpose.msra.mxu0 0
        %632 = vmatprep.subr.bf16.mxu0 0
        %633 = vmatpush1.bf16.xpose.msra.mxu0 0
        %634 = vmatprep.subr.bf16.mxu0 0
        %635 = vmatpush1.bf16.xpose.msra.mxu0 0
        %636 = vmatprep.subr.bf16.mxu0 0
        %637 = vmatpush1.bf16.xpose.msra.mxu0 0
        %638 = vmatprep.subr.bf16.mxu0 0
        %639 = vmatpush1.bf16.xpose.msra.mxu0 0
        %640 = vmatprep.subr.bf16.mxu0 0
        %641 = vmatpush1.bf16.xpose.msra.mxu0 0
        %642 = vmatprep.subr.bf16.mxu0 0
        %643 = vmatpush1.bf16.xpose.msra.mxu0 0
        %644 = vmatprep.subr.bf16.mxu0 0
        %645 = vmatpush1.bf16.xpose.msra.mxu0 0
        %646 = vmatprep.subr.bf16.mxu0 0
        %647 = vmatpush1.bf16.xpose.msra.mxu0 0
        %648 = vmatprep.subr.bf16.mxu0 0
        %649 = vmatpush1.bf16.xpose.msra.mxu0 0
        %650 = vmatprep.subr.bf16.mxu0 0
        %651 = vmatpush1.bf16.xpose.msra.mxu0 0
        %652 = vmatprep.subr.bf16.mxu0 0
        %653 = vmatpush1.bf16.xpose.msra.mxu0 0
        %654 = vmatprep.subr.bf16.mxu0 0
        %655 = vmatpush1.bf16.xpose.msra.mxu0 0
        %656 = vmatprep.subr.bf16.mxu0 0
        %657 = vmatpush1.bf16.xpose.msra.mxu0 0
        %658 = vmatprep.subr.bf16.mxu0 0
        %659 = vmatpush1.bf16.xpose.msra.mxu0 0
        %660 = vmatprep.mubr.bf16.mxu0 0
        %661 = vmatmul.mubr.bf16.gmra.mrb[0].mxu0 %v623
        %v662 = vpop.f32.mrb[0].mxu0
        %v663 = vadd.f32 0.0, %v662
        %v664 = vpop.f32.mrb[0].mxu0
        %v665 = vpop.f32.mrb[0].mxu0
        %v666 = vpop.f32.mrb[0].mxu0
        %667 = vdwg.mxu0
        %v668 = vmul.f32 %v663, 0.35355338
        %v669 = vsel %vm506, %v668, -inf
        %670 = vmax.xlane.f32.xlu0 %v669
        %v671 = vpop.xlane.xlu0 %670
        %v672 = vsub.f32 %v668, %v671
        %v673 = vmul.f32 %v672, 1.442695
        %v674 = vpow.pop %v673
        %v675 = vsel %vm506, %v674, 0.0
        %676 = vadd.xlane.f32.xlu0 %v675
        %v677 = vpop.xlane.xlu0 %676
        %v678 = vrcp.pop %v677
        %v679 = vmul.f32 %v674, %v678
        %v680 = vpack.c.bf16 %v679, %v679
        %681 = vrot.lane.b32.xlu0 %v502, 56
        %v682 = vpop.permute.xlu0 %681
        %v684 = vsel %vm506, %v680, 0
        %v687 = vsel %vm571, %v682, 0
        %689 = vmatprep.subr.bf16.mxu0 0
        %690 = vmatpush1.bf16.msra.mxu0 %v687
        %691 = vmatprep.subr.bf16.mxu0 0
        %692 = vmatpush1.bf16.msra.mxu0 0
        %693 = vmatprep.subr.bf16.mxu0 0
        %694 = vmatpush1.bf16.msra.mxu0 0
        %695 = vmatprep.subr.bf16.mxu0 0
        %696 = vmatpush1.bf16.msra.mxu0 0
        %697 = vmatprep.subr.bf16.mxu0 0
        %698 = vmatpush1.bf16.msra.mxu0 0
        %699 = vmatprep.subr.bf16.mxu0 0
        %700 = vmatpush1.bf16.msra.mxu0 0
        %701 = vmatprep.subr.bf16.mxu0 0
        %702 = vmatpush1.bf16.msra.mxu0 0
        %703 = vmatprep.subr.bf16.mxu0 0
        %704 = vmatpush1.bf16.msra.mxu0 0
        %705 = vmatprep.subr.bf16.mxu0 0
        %706 = vmatpush1.bf16.msra.mxu0 0
        %707 = vmatprep.subr.bf16.mxu0 0
        %708 = vmatpush1.bf16.msra.mxu0 0
        %709 = vmatprep.subr.bf16.mxu0 0
        %710 = vmatpush1.bf16.msra.mxu0 0
        %711 = vmatprep.subr.bf16.mxu0 0
        %712 = vmatpush1.bf16.msra.mxu0 0
        %713 = vmatprep.subr.bf16.mxu0 0
        %714 = vmatpush1.bf16.msra.mxu0 0
        %715 = vmatprep.subr.bf16.mxu0 0
        %716 = vmatpush1.bf16.msra.mxu0 0
        %717 = vmatprep.subr.bf16.mxu0 0
        %718 = vmatpush1.bf16.msra.mxu0 0
        %719 = vmatprep.subr.bf16.mxu0 0
        %720 = vmatpush1.bf16.msra.mxu0 0
        %721 = vmatprep.mubr.bf16.mxu0 0
        %722 = vmatmul.mubr.bf16.gmra.mrb[0].mxu0 %v684
        %v723 = vpop.f32.mrb[0].mxu0
        %v724 = vadd.f32 0.0, %v723
        %v725 = vpop.f32.mrb[0].mxu0
        %v726 = vpop.f32.mrb[0].mxu0
        %v727 = vpop.f32.mrb[0].mxu0
        %728 = vdwg.mxu0
        %v729 = vpack.c.bf16 %v724, %v724
        %v731 = vunpack.c.l.b16 %v729
        %v732 = vpack.c.b16 %v731, %v731
        %733 = vrot.lane.b32.xlu0 %v732, 8
        %v734 = vpop.permute.xlu0 %733
        %vm736 = vcmask 126016
        %737 = vst.msk [vmem:[#allocation2] sm:$0xf] %vm736, %v734
        %738 = vrot.lane.b32.xlu0 %v502, 112
        %v739 = vpop.permute.xlu0 %738
        %740 = vrot.lane.b32.xlu0 %v502, 80
        %v741 = vpop.permute.xlu0 %740
        %v743 = vsel %vm506, %v739, 0
        %v746 = vsel %vm506, %v741, 0
        %748 = vmatprep.subr.bf16.mxu0 0
        %749 = vmatpush1.bf16.xpose.msra.mxu0 %v746
        %750 = vmatprep.subr.bf16.mxu0 0
        %751 = vmatpush1.bf16.xpose.msra.mxu0 0
        %752 = vmatprep.subr.bf16.mxu0 0
        %753 = vmatpush1.bf16.xpose.msra.mxu0 0
        %754 = vmatprep.subr.bf16.mxu0 0
        %755 = vmatpush1.bf16.xpose.msra.mxu0 0
        %756 = vmatprep.subr.bf16.mxu0 0
        %757 = vmatpush1.bf16.xpose.msra.mxu0 0
        %758 = vmatprep.subr.bf16.mxu0 0
        %759 = vmatpush1.bf16.xpose.msra.mxu0 0
        %760 = vmatprep.subr.bf16.mxu0 0
        %761 = vmatpush1.bf16.xpose.msra.mxu0 0
        %762 = vmatprep.subr.bf16.mxu0 0
        %763 = vmatpush1.bf16.xpose.msra.mxu0 0
        %764 = vmatprep.subr.bf16.mxu0 0
        %765 = vmatpush1.bf16.xpose.msra.mxu0 0
        %766 = vmatprep.subr.bf16.mxu0 0
        %767 = vmatpush1.bf16.xpose.msra.mxu0 0
        %768 = vmatprep.subr.bf16.mxu0 0
        %769 = vmatpush1.bf16.xpose.msra.mxu0 0
        %770 = vmatprep.subr.bf16.mxu0 0
        %771 = vmatpush1.bf16.xpose.msra.mxu0 0
        %772 = vmatprep.subr.bf16.mxu0 0
        %773 = vmatpush1.bf16.xpose.msra.mxu0 0
        %774 = vmatprep.subr.bf16.mxu0 0
        %775 = vmatpush1.bf16.xpose.msra.mxu0 0
        %776 = vmatprep.subr.bf16.mxu0 0
        %777 = vmatpush1.bf16.xpose.msra.mxu0 0
        %778 = vmatprep.subr.bf16.mxu0 0
        %779 = vmatpush1.bf16.xpose.msra.mxu0 0
        %780 = vmatprep.mubr.bf16.mxu0 0
        %781 = vmatmul.mubr.bf16.gmra.mrb[0].mxu0 %v743
        %v782 = vpop.f32.mrb[0].mxu0
        %v783 = vadd.f32 0.0, %v782
        %v784 = vpop.f32.mrb[0].mxu0
        %v785 = vpop.f32.mrb[0].mxu0
        %v786 = vpop.f32.mrb[0].mxu0
        %787 = vdwg.mxu0
        %v788 = vmul.f32 %v783, 0.35355338
        %v789 = vsel %vm506, %v788, -inf
        %790 = vmax.xlane.f32.xlu0 %v789
        %v791 = vpop.xlane.xlu0 %790
        %v792 = vsub.f32 %v788, %v791
        %v793 = vmul.f32 %v792, 1.442695
        %v794 = vpow.pop %v793
        %v795 = vsel %vm506, %v794, 0.0
        %796 = vadd.xlane.f32.xlu0 %v795
        %v797 = vpop.xlane.xlu0 %796
        %v798 = vrcp.pop %v797
        %v799 = vmul.f32 %v794, %v798
        %v800 = vpack.c.bf16 %v799, %v799
        %801 = vrot.lane.b32.xlu0 %v502, 48
        %v802 = vpop.permute.xlu0 %801
        %v804 = vsel %vm506, %v800, 0
        %v807 = vsel %vm571, %v802, 0
        %809 = vmatprep.subr.bf16.mxu0 0
        %810 = vmatpush1.bf16.msra.mxu0 %v807
        %811 = vmatprep.subr.bf16.mxu0 0
        %812 = vmatpush1.bf16.msra.mxu0 0
        %813 = vmatprep.subr.bf16.mxu0 0
        %814 = vmatpush1.bf16.msra.mxu0 0
        %815 = vmatprep.subr.bf16.mxu0 0
        %816 = vmatpush1.bf16.msra.mxu0 0
        %817 = vmatprep.subr.bf16.mxu0 0
        %818 = vmatpush1.bf16.msra.mxu0 0
        %819 = vmatprep.subr.bf16.mxu0 0
        %820 = vmatpush1.bf16.msra.mxu0 0
        %821 = vmatprep.subr.bf16.mxu0 0
        %822 = vmatpush1.bf16.msra.mxu0 0
        %823 = vmatprep.subr.bf16.mxu0 0
        %824 = vmatpush1.bf16.msra.mxu0 0
        %825 = vmatprep.subr.bf16.mxu0 0
        %826 = vmatpush1.bf16.msra.mxu0 0
        %827 = vmatprep.subr.bf16.mxu0 0
        %828 = vmatpush1.bf16.msra.mxu0 0
        %829 = vmatprep.subr.bf16.mxu0 0
        %830 = vmatpush1.bf16.msra.mxu0 0
        %831 = vmatprep.subr.bf16.mxu0 0
        %832 = vmatpush1.bf16.msra.mxu0 0
        %833 = vmatprep.subr.bf16.mxu0 0
        %834 = vmatpush1.bf16.msra.mxu0 0
        %835 = vmatprep.subr.bf16.mxu0 0
        %836 = vmatpush1.bf16.msra.mxu0 0
        %837 = vmatprep.subr.bf16.mxu0 0
        %838 = vmatpush1.bf16.msra.mxu0 0
        %839 = vmatprep.subr.bf16.mxu0 0
        %840 = vmatpush1.bf16.msra.mxu0 0
        %841 = vmatprep.mubr.bf16.mxu0 0
        %842 = vmatmul.mubr.bf16.gmra.mrb[0].mxu0 %v804
        %v843 = vpop.f32.mrb[0].mxu0
        %v844 = vadd.f32 0.0, %v843
        %v845 = vpop.f32.mrb[0].mxu0
        %v846 = vpop.f32.mrb[0].mxu0
        %v847 = vpop.f32.mrb[0].mxu0
        %848 = vdwg.mxu0
        %v849 = vpack.c.bf16 %v844, %v844
        %v851 = vunpack.c.l.b16 %v849
        %v852 = vpack.c.b16 %v851, %v851
        %853 = vrot.lane.b32.xlu0 %v852, 16
        %v854 = vpop.permute.xlu0 %853
        %vm856 = vcmask 191616
        %857 = vst.msk [vmem:[#allocation2] sm:$0xf] %vm856, %v854
        %858 = vrot.lane.b32.xlu0 %v502, 104
        %v859 = vpop.permute.xlu0 %858
        %860 = vrot.lane.b32.xlu0 %v502, 72
        %v861 = vpop.permute.xlu0 %860
        %v863 = vsel %vm506, %v859, 0
        %v866 = vsel %vm506, %v861, 0
        %868 = vmatprep.subr.bf16.mxu0 0
        %869 = vmatpush1.bf16.xpose.msra.mxu0 %v866
        %870 = vmatprep.subr.bf16.mxu0 0
        %871 = vmatpush1.bf16.xpose.msra.mxu0 0
        %872 = vmatprep.subr.bf16.mxu0 0
        %873 = vmatpush1.bf16.xpose.msra.mxu0 0
        %874 = vmatprep.subr.bf16.mxu0 0
        %875 = vmatpush1.bf16.xpose.msra.mxu0 0
        %876 = vmatprep.subr.bf16.mxu0 0
        %877 = vmatpush1.bf16.xpose.msra.mxu0 0
        %878 = vmatprep.subr.bf16.mxu0 0
        %879 = vmatpush1.bf16.xpose.msra.mxu0 0
        %880 = vmatprep.subr.bf16.mxu0 0
        %881 = vmatpush1.bf16.xpose.msra.mxu0 0
        %882 = vmatprep.subr.bf16.mxu0 0
        %883 = vmatpush1.bf16.xpose.msra.mxu0 0
        %884 = vmatprep.subr.bf16.mxu0 0
        %885 = vmatpush1.bf16.xpose.msra.mxu0 0
        %886 = vmatprep.subr.bf16.mxu0 0
        %887 = vmatpush1.bf16.xpose.msra.mxu0 0
        %888 = vmatprep.subr.bf16.mxu0 0
        %889 = vmatpush1.bf16.xpose.msra.mxu0 0
        %890 = vmatprep.subr.bf16.mxu0 0
        %891 = vmatpush1.bf16.xpose.msra.mxu0 0
        %892 = vmatprep.subr.bf16.mxu0 0
        %893 = vmatpush1.bf16.xpose.msra.mxu0 0
        %894 = vmatprep.subr.bf16.mxu0 0
        %895 = vmatpush1.bf16.xpose.msra.mxu0 0
        %896 = vmatprep.subr.bf16.mxu0 0
        %897 = vmatpush1.bf16.xpose.msra.mxu0 0
        %898 = vmatprep.subr.bf16.mxu0 0
        %899 = vmatpush1.bf16.xpose.msra.mxu0 0
        %900 = vmatprep.mubr.bf16.mxu0 0
        %901 = vmatmul.mubr.bf16.gmra.mrb[0].mxu0 %v863
        %v902 = vpop.f32.mrb[0].mxu0
        %v903 = vadd.f32 0.0, %v902
        %v904 = vpop.f32.mrb[0].mxu0
        %v905 = vpop.f32.mrb[0].mxu0
        %v906 = vpop.f32.mrb[0].mxu0
        %907 = vdwg.mxu0
        %v908 = vmul.f32 %v903, 0.35355338
        %v909 = vsel %vm506, %v908, -inf
        %910 = vmax.xlane.f32.xlu0 %v909
        %v911 = vpop.xlane.xlu0 %910
        %v912 = vsub.f32 %v908, %v911
        %v913 = vmul.f32 %v912, 1.442695
        %v914 = vpow.pop %v913
        %v915 = vsel %vm506, %v914, 0.0
        %916 = vadd.xlane.f32.xlu0 %v915
        %v917 = vpop.xlane.xlu0 %916
        %v918 = vrcp.pop %v917
        %v919 = vmul.f32 %v914, %v918
        %v920 = vpack.c.bf16 %v919, %v919
        %921 = vrot.lane.b32.xlu0 %v502, 40
        %v922 = vpop.permute.xlu0 %921
        %v924 = vsel %vm506, %v920, 0
        %v927 = vsel %vm571, %v922, 0
        %929 = vmatprep.subr.bf16.mxu0 0
        %930 = vmatpush1.bf16.msra.mxu0 %v927
        %931 = vmatprep.subr.bf16.mxu0 0
        %932 = vmatpush1.bf16.msra.mxu0 0
        %933 = vmatprep.subr.bf16.mxu0 0
        %934 = vmatpush1.bf16.msra.mxu0 0
        %935 = vmatprep.subr.bf16.mxu0 0
        %936 = vmatpush1.bf16.msra.mxu0 0
        %937 = vmatprep.subr.bf16.mxu0 0
        %938 = vmatpush1.bf16.msra.mxu0 0
        %939 = vmatprep.subr.bf16.mxu0 0
        %940 = vmatpush1.bf16.msra.mxu0 0
        %941 = vmatprep.subr.bf16.mxu0 0
        %942 = vmatpush1.bf16.msra.mxu0 0
        %943 = vmatprep.subr.bf16.mxu0 0
        %944 = vmatpush1.bf16.msra.mxu0 0
        %945 = vmatprep.subr.bf16.mxu0 0
        %946 = vmatpush1.bf16.msra.mxu0 0
        %947 = vmatprep.subr.bf16.mxu0 0
        %948 = vmatpush1.bf16.msra.mxu0 0
        %949 = vmatprep.subr.bf16.mxu0 0
        %950 = vmatpush1.bf16.msra.mxu0 0
        %951 = vmatprep.subr.bf16.mxu0 0
        %952 = vmatpush1.bf16.msra.mxu0 0
        %953 = vmatprep.subr.bf16.mxu0 0
        %954 = vmatpush1.bf16.msra.mxu0 0
        %955 = vmatprep.subr.bf16.mxu0 0
        %956 = vmatpush1.bf16.msra.mxu0 0
        %957 = vmatprep.subr.bf16.mxu0 0
        %958 = vmatpush1.bf16.msra.mxu0 0
        %959 = vmatprep.subr.bf16.mxu0 0
        %960 = vmatpush1.bf16.msra.mxu0 0
        %961 = vmatprep.mubr.bf16.mxu0 0
        %962 = vmatmul.mubr.bf16.gmra.mrb[0].mxu0 %v924
        %v963 = vpop.f32.mrb[0].mxu0
        %v964 = vadd.f32 0.0, %v963
        %v965 = vpop.f32.mrb[0].mxu0
        %v966 = vpop.f32.mrb[0].mxu0
        %v967 = vpop.f32.mrb[0].mxu0
        %968 = vdwg.mxu0
        %v969 = vpack.c.bf16 %v964, %v964
        %v971 = vunpack.c.l.b16 %v969
        %v972 = vpack.c.b16 %v971, %v971
        %973 = vrot.lane.b32.xlu0 %v972, 24
        %v974 = vpop.permute.xlu0 %973
        %vm976 = vcmask 257216
        %977 = vst.msk [vmem:[#allocation2] sm:$0xf] %vm976, %v974
        %v978 = vld [vmem:[#allocation2] sm:$0xf]
        %v979 = vld [vmem:[%s4] sm:$0xf]
        %v980 = vld [vmem:[%s4 + $0x4] sm:$0xf]
        %v981 = vld [vmem:[%s4 + $0x8] sm:$0xf]
        %v982 = vld [vmem:[%s4 + $0xc] sm:$0xf]
        %v983 = vld [vmem:[%s5] sm:$0x1]
        %v985 = vlaneseq
        %v986 = vshrl.u32 %v985, 7
        %v987 = vsub.s32 0, %v986
        %v988 = vrot.slane %v983, %v987
        %v994 = vunpack.c.l.b16 %v979
        %v995 = vunpack.c.l.b16 %v980
        %v996 = vunpack.c.l.b16 %v981
        %v997 = vunpack.c.l.b16 %v982
        %v998 = vpack.c.b16 %v995, %v994
        %v999 = vpack.c.b16 %v997, %v996
        %v1003 = vsel %vm413, %v978, 0
        %1005 = vmatprep.subr.bf16.mxu0 0
        %1006 = vmatpush1.bf16.msra.mxu0 %v998
        %1007 = vmatprep.subr.bf16.mxu0 0
        %1008 = vmatpush1.bf16.msra.mxu0 %v999
        %1009 = vmatprep.subr.bf16.mxu0 0
        %1010 = vmatpush1.bf16.msra.mxu0 0
        %1011 = vmatprep.subr.bf16.mxu0 0
        %1012 = vmatpush1.bf16.msra.mxu0 0
        %1013 = vmatprep.subr.bf16.mxu0 0
        %1014 = vmatpush1.bf16.msra.mxu0 0
        %1015 = vmatprep.subr.bf16.mxu0 0
        %1016 = vmatpush1.bf16.msra.mxu0 0
        %1017 = vmatprep.subr.bf16.mxu0 0
        %1018 = vmatpush1.bf16.msra.mxu0 0
        %1019 = vmatprep.subr.bf16.mxu0 0
        %1020 = vmatpush1.bf16.msra.mxu0 0
        %1021 = vmatprep.subr.bf16.mxu0 0
        %1022 = vmatpush1.bf16.msra.mxu0 0
        %1023 = vmatprep.subr.bf16.mxu0 0
        %1024 = vmatpush1.bf16.msra.mxu0 0
        %1025 = vmatprep.subr.bf16.mxu0 0
        %1026 = vmatpush1.bf16.msra.mxu0 0
        %1027 = vmatprep.subr.bf16.mxu0 0
        %1028 = vmatpush1.bf16.msra.mxu0 0
        %1029 = vmatprep.subr.bf16.mxu0 0
        %1030 = vmatpush1.bf16.msra.mxu0 0
        %1031 = vmatprep.subr.bf16.mxu0 0
        %1032 = vmatpush1.bf16.msra.mxu0 0
        %1033 = vmatprep.subr.bf16.mxu0 0
        %1034 = vmatpush1.bf16.msra.mxu0 0
        %1035 = vmatprep.subr.bf16.mxu0 0
        %1036 = vmatpush1.bf16.msra.mxu0 0
        %1037 = vmatprep.mubr.bf16.mxu0 0
        %1038 = vmatmul.mubr.bf16.gmra.mrb[0].mxu0 %v1003
        %v1039 = vpop.f32.mrb[0].mxu0
        %v1040 = vadd.f32 %v988, %v1039
        %v1041 = vpop.f32.mrb[0].mxu0
        %v1042 = vpop.f32.mrb[0].mxu0
        %v1043 = vpop.f32.mrb[0].mxu0
        %1044 = vdwg.mxu0
        %v1045 = vadd.f32 %v410, %v1040
        %v1046 = vld [vmem:[%s6] sm:$0x1]
        %v1047 = vld [vmem:[%s7] sm:$0x1]
        %v1048 = vsel %vm413, %v1045, 0.0
        %1049 = vadd.xlane.f32.xlu0 %v1048
        %v1050 = vpop.xlane.xlu0 %1049
        %v1051 = vmul.f32 %v1050, %v417
        %v1052 = vsub.f32 %v1045, %v1051
        %v1053 = vmul.f32 %v1052, %v1052
        %v1054 = vsel %vm413, %v1053, 0.0
        %1055 = vadd.xlane.f32.xlu0 %v1054
        %v1056 = vpop.xlane.xlu0 %1055
        %v1057 = vmul.f32 %v1056, %v417
        %v1058 = vadd.f32 %v1057, 1e-05
        %v1059 = vrsqrt.pop %v1058
        %v1060 = vmul.f32 %v1052, %v1059
        %v1062 = vlaneseq
        %v1063 = vshrl.u32 %v1062, 7
        %v1064 = vsub.s32 0, %v1063
        %v1065 = vrot.slane %v1046, %v1064
        %v1067 = vmul.f32 %v1060, %v1065
        %v1069 = vlaneseq
        %v1070 = vshrl.u32 %v1069, 7
        %v1071 = vsub.s32 0, %v1070
        %v1072 = vrot.slane %v1047, %v1071
        %v1074 = vadd.f32 %v1067, %v1072
        %v1075 = vpack.c.bf16 %v1074, %v1074
        %v1076 = vld [vmem:[%s8] sm:$0xf]
        %v1077 = vld [vmem:[%s8 + $0x4] sm:$0xf]
        %v1078 = vld [vmem:[%s8 + $0x8] sm:$0xf]
        %v1079 = vld [vmem:[%s8 + $0xc] sm:$0xf]
        %v1080 = vld [vmem:[%s9] sm:$0x1]
        %v1082 = vlaneseq
        %v1083 = vshrl.u32 %v1082, 7
        %v1084 = vsub.s32 0, %v1083
        %v1085 = vrot.slane %v1080, %v1084
        %v1091 = vunpack.c.l.b16 %v1076
        %v1092 = vunpack.c.l.b16 %v1077
        %v1093 = vunpack.c.l.b16 %v1078
        %v1094 = vunpack.c.l.b16 %v1079
        %v1095 = vpack.c.b16 %v1092, %v1091
        %v1096 = vpack.c.b16 %v1094, %v1093
        %v1100 = vsel %vm413, %v1075, 0
        %1102 = vmatprep.subr.bf16.mxu0 0
        %1103 = vmatpush1.bf16.msra.mxu0 %v1095
        %1104 = vmatprep.subr.bf16.mxu0 0
        %1105 = vmatpush1.bf16.msra.mxu0 %v1096
        %1106 = vmatprep.subr.bf16.mxu0 0
        %1107 = vmatpush1.bf16.msra.mxu0 0
        %1108 = vmatprep.subr.bf16.mxu0 0
        %1109 = vmatpush1.bf16.msra.mxu0 0
        %1110 = vmatprep.subr.bf16.mxu0 0
        %1111 = vmatpush1.bf16.msra.mxu0 0
        %1112 = vmatprep.subr.bf16.mxu0 0
        %1113 = vmatpush1.bf16.msra.mxu0 0
        %1114 = vmatprep.subr.bf16.mxu0 0
        %1115 = vmatpush1.bf16.msra.mxu0 0
        %1116 = vmatprep.subr.bf16.mxu0 0
        %1117 = vmatpush1.bf16.msra.mxu0 0
        %1118 = vmatprep.subr.bf16.mxu0 0
        %1119 = vmatpush1.bf16.msra.mxu0 0
        %1120 = vmatprep.subr.bf16.mxu0 0
        %1121 = vmatpush1.bf16.msra.mxu0 0
        %1122 = vmatprep.subr.bf16.mxu0 0
        %1123 = vmatpush1.bf16.msra.mxu0 0
        %1124 = vmatprep.subr.bf16.mxu0 0
        %1125 = vmatpush1.bf16.msra.mxu0 0
        %1126 = vmatprep.subr.bf16.mxu0 0
        %1127 = vmatpush1.bf16.msra.mxu0 0
        %1128 = vmatprep.subr.bf16.mxu0 0
        %1129 = vmatpush1.bf16.msra.mxu0 0
        %1130 = vmatprep.subr.bf16.mxu0 0
        %1131 = vmatpush1.bf16.msra.mxu0 0
        %1132 = vmatprep.subr.bf16.mxu0 0
        %1133 = vmatpush1.bf16.msra.mxu0 0
        %1134 = vmatprep.mubr.bf16.mxu0 0
        %1135 = vmatmul.mubr.bf16.gmra.mrb[0].mxu0 %v1100
        %v1136 = vpop.f32.mrb[0].mxu0
        %v1137 = vadd.f32 %v1085, %v1136
        %v1138 = vpop.f32.mrb[0].mxu0
        %v1139 = vpop.f32.mrb[0].mxu0
        %v1140 = vpop.f32.mrb[0].mxu0
        %1141 = vdwg.mxu0
        %v1142 = vmul.f32 %v1137, 0.5
        %v1143 = vmul.f32 %v1137, 0.044715
        %v1144 = vmul.f32 %v1143, %v1137
        %v1145 = vmul.f32 %v1144, %v1137
        %v1146 = vadd.f32 %v1137, %v1145
        %v1147 = vmul.f32 %v1146, 0.7978846
        %v1148 = vtanh.pop %v1147
        %v1149 = vadd.f32 %v1148, 1.0
        %v1150 = vmul.f32 %v1142, %v1149
        %v1151 = vpack.c.bf16 %v1150, %v1150
        %v1152 = vld [vmem:[%s10] sm:$0xf]
        %v1153 = vld [vmem:[%s10 + $0x4] sm:$0xf]
        %v1154 = vld [vmem:[%s10 + $0x8] sm:$0xf]
        %v1155 = vld [vmem:[%s10 + $0xc] sm:$0xf]
        %v1156 = vld [vmem:[%s10 + $0x10] sm:$0xf]
        %v1157 = vld [vmem:[%s10 + $0x14] sm:$0xf]
        %v1158 = vld [vmem:[%s10 + $0x18] sm:$0xf]
        %v1159 = vld [vmem:[%s10 + $0x1c] sm:$0xf]
        %v1160 = vld [vmem:[%s10 + $0x20] sm:$0xf]
        %v1161 = vld [vmem:[%s10 + $0x24] sm:$0xf]
        %v1162 = vld [vmem:[%s10 + $0x28] sm:$0xf]
        %v1163 = vld [vmem:[%s10 + $0x2c] sm:$0xf]
        %v1164 = vld [vmem:[%s10 + $0x30] sm:$0xf]
        %v1165 = vld [vmem:[%s10 + $0x34] sm:$0xf]
        %v1166 = vld [vmem:[%s10 + $0x38] sm:$0xf]
        %v1167 = vld [vmem:[%s10 + $0x3c] sm:$0xf]
        %v1168 = vld [vmem:[%s11] sm:$0x1]
        %v1170 = vlaneseq
        %v1171 = vshrl.u32 %v1170, 7
        %v1172 = vsub.s32 0, %v1171
        %v1173 = vrot.slane %v1168, %v1172
        %v1191 = vunpack.c.l.b16 %v1152
        %v1192 = vunpack.c.l.b16 %v1153
        %v1193 = vunpack.c.l.b16 %v1154
        %v1194 = vunpack.c.l.b16 %v1155
        %v1195 = vunpack.c.l.b16 %v1156
        %v1196 = vunpack.c.l.b16 %v1157
        %v1197 = vunpack.c.l.b16 %v1158
        %v1198 = vunpack.c.l.b16 %v1159
        %v1199 = vunpack.c.l.b16 %v1160
        %v1200 = vunpack.c.l.b16 %v1161
        %v1201 = vunpack.c.l.b16 %v1162
        %v1202 = vunpack.c.l.b16 %v1163
        %v1203 = vunpack.c.l.b16 %v1164
        %v1204 = vunpack.c.l.b16 %v1165
        %v1205 = vunpack.c.l.b16 %v1166
        %v1206 = vunpack.c.l.b16 %v1167
        %v1207 = vpack.c.b16 %v1192, %v1191
        %v1208 = vpack.c.b16 %v1194, %v1193
        %v1209 = vpack.c.b16 %v1196, %v1195
        %v1210 = vpack.c.b16 %v1198, %v1197
        %v1211 = vpack.c.b16 %v1200, %v1199
        %v1212 = vpack.c.b16 %v1202, %v1201
        %v1213 = vpack.c.b16 %v1204, %v1203
        %v1214 = vpack.c.b16 %v1206, %v1205
        %1223 = vmatprep.subr.bf16.mxu0 0
        %1224 = vmatpush1.bf16.msra.mxu0 %v1207
        %1225 = vmatprep.subr.bf16.mxu0 0
        %1226 = vmatpush1.bf16.msra.mxu0 %v1208
        %1227 = vmatprep.subr.bf16.mxu0 0
        %1228 = vmatpush1.bf16.msra.mxu0 %v1209
        %1229 = vmatprep.subr.bf16.mxu0 0
        %1230 = vmatpush1.bf16.msra.mxu0 %v1210
        %1231 = vmatprep.subr.bf16.mxu0 0
        %1232 = vmatpush1.bf16.msra.mxu0 %v1211
        %1233 = vmatprep.subr.bf16.mxu0 0
        %1234 = vmatpush1.bf16.msra.mxu0 %v1212
        %1235 = vmatprep.subr.bf16.mxu0 0
        %1236 = vmatpush1.bf16.msra.mxu0 %v1213
        %1237 = vmatprep.subr.bf16.mxu0 0
        %1238 = vmatpush1.bf16.msra.mxu0 %v1214
        %1239 = vmatprep.subr.bf16.mxu0 0
        %1240 = vmatpush1.bf16.msra.mxu0 0
        %1241 = vmatprep.subr.bf16.mxu0 0
        %1242 = vmatpush1.bf16.msra.mxu0 0
        %1243 = vmatprep.subr.bf16.mxu0 0
        %1244 = vmatpush1.bf16.msra.mxu0 0
        %1245 = vmatprep.subr.bf16.mxu0 0
        %1246 = vmatpush1.bf16.msra.mxu0 0
        %1247 = vmatprep.subr.bf16.mxu0 0
        %1248 = vmatpush1.bf16.msra.mxu0 0
        %1249 = vmatprep.subr.bf16.mxu0 0
        %1250 = vmatpush1.bf16.msra.mxu0 0
        %1251 = vmatprep.subr.bf16.mxu0 0
        %1252 = vmatpush1.bf16.msra.mxu0 0
        %1253 = vmatprep.subr.bf16.mxu0 0
        %1254 = vmatpush1.bf16.msra.mxu0 0
        %1255 = vmatprep.mubr.bf16.mxu0 0
        %1256 = vmatmul.mubr.bf16.gmra.mrb[0].mxu0 %v1151
        %v1257 = vpop.f32.mrb[0].mxu0
        %v1258 = vadd.f32 %v1173, %v1257
        %v1259 = vpop.f32.mrb[0].mxu0
        %v1260 = vpop.f32.mrb[0].mxu0
        %v1261 = vpop.f32.mrb[0].mxu0
        %1262 = vdwg.mxu0
        %v1263 = vadd.f32 %v1045, %v1258
        %1264 = vst.msk [vmem:[%s404] sm:$0xff] %vm413, %v1263
        %s1265 = sand.u32 %s291, 1
        %s1266 = scalar_lea.sflag [#allocation4], %s1265
        %s1267 = sand.u32 %s291, 1
        %s1268 = smul.addr %s1267, 8
        %s1269 = scalar_lea.vmem [#allocation3], %s1268
        // Predicated region
        $region69: #{tpu_custom_call.1} parent=67 // pred_check
          %p1270 = pneg %p301
        $region70: #{tpu_custom_call.1} parent=67 // pred_check_branch
          %1272 = sbr.rel (%p1270) target = $region72
        $region71: #{tpu_custom_call.1} parent=67 // pred_region
          %s1274 = ssub.s32 128, 128
          %1275 = vsyncadd %s1266, %s1274
          %s1276 = smul.addr %s26, 128
          %s1277 = scalar_lea.hbm %s12, %s1276
          %s1279 = sshll.u32 %s1269, 4
          %s1280 = int_to_ptr.vmem [resolvable:$true] %s1279
          %1282 = dma.vmem_to_hbm [thread:$0]  %s1280, 128, %s1277, %s1266
        $region72: #{tpu_custom_call.1} parent=67 // pred_fallthru
          _
      $region68: #{tpu_custom_call.1} parent=5 // pred_fallthru
        _
      %p1283 = scmp.le.s32.totalorder 2, %s21
      // Predicated region
      $region73: #{tpu_custom_call.1} parent=5 // pred_check
        %p1284 = pneg %p1283
      $region74: #{tpu_custom_call.1} parent=5 // pred_check_branch
        %1286 = sbr.rel (%p1284) target = $region76
      $region75: #{tpu_custom_call.1} parent=5 // pred_region
        %s1287 = ssub.s32 %s21, 2
        // Predicated region
        $region77: #{tpu_custom_call.1} parent=75 // pred_check
          %p1288 = pneg %p307
        $region78: #{tpu_custom_call.1} parent=75 // pred_check_branch
          %1290 = sbr.rel (%p1288) target = $region80
        $region79: #{tpu_custom_call.1} parent=75 // pred_region
          %s1291 = sand.u32 %s292, 1
          %s1292 = scalar_lea.sflag [#allocation4], %s1291
          %s1293 = sand.u32 %s292, 1
          %s1294 = smul.addr %s1293, 8
          %s1295 = scalar_lea.vmem [#allocation3], %s1294
          %1296 = dma.done %s1292, 128
        $region80: #{tpu_custom_call.1} parent=75 // pred_fallthru
          _
      $region76: #{tpu_custom_call.1} parent=5 // pred_fallthru
        _
    $region6: #{tpu_custom_call.1} parent=1 // loop_footer
      %s25 = sadd.s32 1, %s21
    $region7: #{tpu_custom_call.1} parent=1 // loop_footer_branch
      %20 = sbr.rel target = $region3
    $region8: #{tpu_custom_call.1} parent=1 // loop_exit
      _
    %1297 = vsyncpa [#allocation4], 1
    %s1298 = scalar_lea.sflag [#allocation4], 1
    %1299 = vsyncpa %s1298, 1

</llo_original>
